<compile_context>
chip_gen: v7x
topology: tpu7x:2x2x1
jax: 0.10.0
libtpu: 0.0.40
codegen_flags: <defaults>
</compile_context>

<pallas_src>
import functools

import jax
import jax.numpy as jnp
from jax.experimental import pallas as pl
from jax.experimental.pallas import tpu as pltpu

_OUT_LANES = 128  # lane-dense combined output: [:, :3] = logits, [:, 3:4] = confidence


def _anomaly_head_kernel(
    hs_ref,                # (tb, ts, H)   streamed input tile
    wf1_ref, bf1_ref,      # (H, h2+h4), (1, h2+h4)   fused [w1 | wc1]
    w2_ref, b2_ref,        # (h2, h4), (1, h4)
    w3p_ref, wc2p_ref,     # (h4, 128), (h4, 128)     lane-padded final weights
    bf3_ref,               # (1, 128)                 lane-padded final bias
    out_ref,               # (tb, 128)     combined lane-dense output
    acc_ref,               # (tb, 1, H) f32 running sequence-sum scratch
    *, inv_seq_len, h2, seq_len, block_s, ragged_s,
):
    s = pl.program_id(1)

    @pl.when(s == 0)
    def _():
        acc_ref[...] = jnp.zeros_like(acc_ref)

    x = hs_ref[...]                                                  # (tb, ts, H)
    if ragged_s:  # static: only emitted when S % ts != 0
        pos = s * block_s + jax.lax.broadcasted_iota(jnp.int32, (1, block_s, 1), 1)
        x = jnp.where(pos < seq_len, x, jnp.zeros_like(x))

    # Sequence partial-sum on the MXU: ones-row batched matmul over ts, f32 acc.
    ones = jnp.ones((x.shape[0], 1, x.shape[1]), x.dtype)            # (tb, 1, ts)
    acc_ref[...] += jnp.einsum("bqs,bsh->bqh", ones, x,
                               preferred_element_type=jnp.float32)   # (tb, 1, H)

    @pl.when(s == pl.num_programs(1) - 1)
    def _():
        pooled = acc_ref[...][:, 0, :] * inv_seq_len                 # (tb, H) f32

        # Fused first layer: one MXU push on pooled for both branches.
        a = jnp.dot(pooled, wf1_ref[...], preferred_element_type=jnp.float32)
        a = jnp.maximum(a + bf1_ref[...], 0.0)                       # (tb, h2+h4)
        h1 = a[:, :h2]                                               # classifier branch
        c1 = a[:, h2:]                                               # confidence branch

        hb = jnp.dot(h1, w2_ref[...], preferred_element_type=jnp.float32)
        hb = jnp.maximum(hb + b2_ref[...], 0.0)                      # (tb, h4)

        # Lane-padded final layer: two small dots, no lane-axis concatenate.
        pre = (jnp.dot(hb, w3p_ref[...], preferred_element_type=jnp.float32)
               + jnp.dot(c1, wc2p_ref[...], preferred_element_type=jnp.float32)
               + bf3_ref[...])                                       # (tb, 128)
        lane = jax.lax.broadcasted_iota(jnp.int32, pre.shape, 1)
        out_ref[...] = jnp.where(lane == 3, jax.nn.sigmoid(pre), pre).astype(out_ref.dtype)


def _pick_batch_tile(B):
    """Multiple-of-8 divisor of B giving >=2 batch programs (so the 'parallel'
    axis can shard across v7x's two TensorCores); otherwise the full batch."""
    for d in (32, 24, 16, 8):
        if B % d == 0 and B // d >= 2:
            return d
    return B


def _vmem_capacity_bytes():
    try:
        cap = getattr(pltpu.get_tpu_info(), "vmem_capacity_bytes", None)
        if cap:
            return int(cap)
    except Exception:
        pass
    return 64 << 20  # conservative default (v7x per-core VMEM)


def anomaly_detection_head(hidden_states, params):
    """Full AnomalyDetectionHead forward in one streaming Pallas kernel.

    hidden_states: (B, S, H) float32 or bfloat16 (accumulation is always f32).
    Returns {'anomaly_logits': (B, 3), 'confidence_score': (B, 1)}.
    """
    B, S, H = hidden_states.shape
    h2, h4 = H // 2, H // 4
    wdt = params["w1"].dtype  # keep weights in their native dtype (no f32 upcast)

    # ---- host-side weight packing (fusion + lane padding), native dtype ----
    wf1 = jnp.concatenate([params["w1"], params["wc1"]], axis=1).astype(wdt)   # (H, h2+h4)
    bf1 = jnp.concatenate([params["b1"], params["bc1"]], axis=1).astype(wdt)   # (1, h2+h4)
    w2 = params["w2"].astype(wdt)                                              # (h2, h4)
    b2 = params["b2"].astype(wdt)                                              # (1, h4)
    w3p = jnp.zeros((h4, _OUT_LANES), wdt).at[:, :3].set(params["w3"].astype(wdt))
    wc2p = jnp.zeros((h4, _OUT_LANES), wdt).at[:, 3:4].set(params["wc2"].astype(wdt))
    bf3 = (jnp.zeros((1, _OUT_LANES), wdt)
           .at[:, :3].set(params["b3"].astype(wdt))
           .at[:, 3:4].set(params["bc2"].astype(wdt)))
    weights = (wf1, bf1, w2, b2, w3p, wc2p, bf3)
    weight_bytes = sum(int(w.size) * w.dtype.itemsize for w in weights)

    itemsize = jnp.dtype(hidden_states.dtype).itemsize
    tb = _pick_batch_tile(B)

    vmem_cap = _vmem_capacity_bytes()
    vmem_budget = max(32 << 20, vmem_cap - (16 << 20))           # ~112 MiB v5e/v6e, ~48 MiB v7x
    target_tile = (8 << 20) if vmem_cap > (64 << 20) else (4 << 20)

    def _run(single_buffer_weights):
        w_buf = 1 if single_buffer_weights else 2
        _const_idx = lambda b, s: (0, 0)
        if single_buffer_weights:
            # Constant-index resident weights: no need for double buffering.
            w_specs = [pl.BlockSpec(w.shape, _const_idx, pipeline_mode=pl.Buffered(1))
                       for w in weights]
        else:
            w_specs = [pl.BlockSpec(w.shape, _const_idx) for w in weights]

        # ---- tiling: stream hidden_states, keep weights resident ----
        avail_stream = max(1 << 20, vmem_budget - w_buf * weight_bytes - (4 << 20))
        tile_bytes = min(target_tile, avail_stream // 2)         # input is double-buffered
        ts_cap = max(8, tile_bytes // max(1, tb * H * itemsize))
        ts = S if S <= ts_cap else max(8, (ts_cap // 8) * 8)
        grid = (B // tb, pl.cdiv(S, ts))
        ragged_s = (S % ts) != 0

        hs_tile_bytes = tb * ts * H * itemsize
        vmem_needed = (2 * hs_tile_bytes              # double-buffered input stream
                       + w_buf * weight_bytes         # resident weights
                       + 2 * tb * _OUT_LANES * 4      # output block
                       + tb * 8 * H * 4)              # (tb,1,H) f32 scratch (sublane-padded)
        vmem_limit = int(min(max(vmem_needed + (4 << 20), 16 << 20), vmem_budget))

        cost = pl.CostEstimate(
            flops=int(2 * B * S * H
                      + 2 * B * (H * (h2 + h4) + h2 * h4 + 2 * h4 * _OUT_LANES)),
            transcendentals=int(B * _OUT_LANES),
            bytes_accessed=int(B * S * H * itemsize + weight_bytes + B * _OUT_LANES * 4),
        )

        kernel = functools.partial(
            _anomaly_head_kernel,
            inv_seq_len=1.0 / S, h2=h2, seq_len=S, block_s=ts, ragged_s=ragged_s)

        return pl.pallas_call(
            kernel,
            out_shape=jax.ShapeDtypeStruct((B, _OUT_LANES), jnp.float32),
            grid_spec=pltpu.PrefetchScalarGridSpec(
                num_scalar_prefetch=0,
                grid=grid,
                in_specs=[pl.BlockSpec((tb, ts, H), lambda b, s: (b, s, 0))] + w_specs,
                out_specs=pl.BlockSpec((tb, _OUT_LANES), lambda b, s: (b, 0)),
                scratch_shapes=[pltpu.VMEM((tb, 1, H), jnp.float32)],
            ),
            compiler_params=pltpu.CompilerParams(
                dimension_semantics=("parallel", "arbitrary"),
                vmem_limit_bytes=vmem_limit,
            ),
            cost_estimate=cost,
        )(hidden_states, *weights)

    try:
        out = _run(single_buffer_weights=True)
    except Exception:
        # Older Pallas without pipeline_mode / Buffered(1): default double-buffering.
        out = _run(single_buffer_weights=False)

    return {"anomaly_logits": out[:, :3], "confidence_score": out[:, 3:4]}


def init_params(key, hidden_size):
    """Deterministic synthetic parameter init (shapes from the module __init__)."""
    h2 = hidden_size // 2
    h4 = hidden_size // 4
    ks = jax.random.split(key, 10)
    scale = 0.05

    def w(k, shape):
        return (scale * jax.random.normal(k, shape)).astype(jnp.float32)

    return {
        # anomaly_classifier
        "w1": w(ks[0], (hidden_size, h2)),  "b1": w(ks[1], (1, h2)),
        "w2": w(ks[2], (h2, h4)),           "b2": w(ks[3], (1, h4)),
        "w3": w(ks[4], (h4, 3)),            "b3": w(ks[5], (1, 3)),
        # confidence_estimator
        "wc1": w(ks[6], (hidden_size, h4)), "bc1": w(ks[7], (1, h4)),
        "wc2": w(ks[8], (h4, 1)),           "bc2": w(ks[9], (1, 1)),
    }


def reference_forward(hidden_states, p):
    """Plain-JAX reference of the PyTorch forward (dropout = identity)."""
    pooled = jnp.mean(hidden_states.astype(jnp.float32), axis=1)
    h1 = jnp.maximum(pooled @ p["w1"] + p["b1"], 0.0)
    h2 = jnp.maximum(h1 @ p["w2"] + p["b2"], 0.0)
    logits = h2 @ p["w3"] + p["b3"]
    c1 = jnp.maximum(pooled @ p["wc1"] + p["bc1"], 0.0)
    conf = jax.nn.sigmoid(c1 @ p["wc2"] + p["bc2"])
    return {"anomaly_logits": logits, "confidence_score": conf}


if __name__ == "__main__":
    # Small shapes consistent with the module: (batch=2, seq=8, hidden=32).
    B, S, H = 2, 8, 32
    key = jax.random.PRNGKey(0)
    k_x, k_p = jax.random.split(key)
    hidden_states = jax.random.normal(k_x, (B, S, H), dtype=jnp.float32)
    params = init_params(k_p, H)

    out = anomaly_detection_head(hidden_states, params)
    jax.block_until_ready(out)

    ref = reference_forward(hidden_states, params)
    assert out["anomaly_logits"].shape == (B, 3)
    assert out["confidence_score"].shape == (B, 1)
    assert jnp.allclose(out["anomaly_logits"], ref["anomaly_logits"], atol=1e-4)
    assert jnp.allclose(out["confidence_score"], ref["confidence_score"], atol=1e-4)

    print("KERNEL_OK")
</pallas_src>

<mosaic_0001>
module attributes {stable_mosaic.version = 11 : i64} {
  func.func @_anomaly_head_kernel(%arg0: i32, %arg1: i32, %arg2: memref<2x8x32xf32, #tpu.memory_space<vmem>>, %arg3: memref<32x24xf32, #tpu.memory_space<vmem>>, %arg4: memref<1x24xf32, #tpu.memory_space<vmem>>, %arg5: memref<16x8xf32, #tpu.memory_space<vmem>>, %arg6: memref<1x8xf32, #tpu.memory_space<vmem>>, %arg7: memref<8x128xf32, #tpu.memory_space<vmem>>, %arg8: memref<8x128xf32, #tpu.memory_space<vmem>>, %arg9: memref<1x128xf32, #tpu.memory_space<vmem>>, %arg10: memref<2x128xf32, #tpu.memory_space<vmem>>, %arg11: memref<2x1x32xf32, #tpu.memory_space<vmem>>) attributes {dimension_semantics = [#tpu.dimension_semantics<parallel>, #tpu.dimension_semantics<arbitrary>], iteration_bounds = array<i64: 1, 1>, scalar_prefetch = 0 : i64, scratch_operands = 1 : i64, tpu.core_type = #tpu.core_type<tc>, window_params = [{transform_indices = @transform_0, window_bounds = array<i64: 2, 8, 32>}, {pipeline_mode = #tpu.pipeline_mode<synchronous>, transform_indices = @transform_1, window_bounds = array<i64: 32, 24>}, {pipeline_mode = #tpu.pipeline_mode<synchronous>, transform_indices = @transform_2, window_bounds = array<i64: 1, 24>}, {pipeline_mode = #tpu.pipeline_mode<synchronous>, transform_indices = @transform_3, window_bounds = array<i64: 16, 8>}, {pipeline_mode = #tpu.pipeline_mode<synchronous>, transform_indices = @transform_4, window_bounds = array<i64: 1, 8>}, {pipeline_mode = #tpu.pipeline_mode<synchronous>, transform_indices = @transform_5, window_bounds = array<i64: 8, 128>}, {pipeline_mode = #tpu.pipeline_mode<synchronous>, transform_indices = @transform_6, window_bounds = array<i64: 8, 128>}, {pipeline_mode = #tpu.pipeline_mode<synchronous>, transform_indices = @transform_7, window_bounds = array<i64: 1, 128>}, {transform_indices = @transform_8, window_bounds = array<i64: 2, 128>}]} {
    %c0_i32 = arith.constant 0 : i32
    %0 = arith.cmpi eq, %arg1, %c0_i32 : i32
    %1 = arith.extui %0 : i1 to i32
    %c0_i32_0 = arith.constant 0 : i32
    %2 = arith.cmpi ne, %1, %c0_i32_0 : i32
    scf.if %2 {
      %cst_12 = arith.constant 0.000000e+00 : f32
      %12 = vector.broadcast %cst_12 : f32 to vector<2x1x32xf32>
      %c0_13 = arith.constant 0 : index
      %c0_14 = arith.constant 0 : index
      %c0_15 = arith.constant 0 : index
      %13 = vector.load %arg11[%c0_13, %c0_14, %c0_15] : memref<2x1x32xf32, #tpu.memory_space<vmem>>, vector<2x1x32xf32>
      tpu.vector_store %arg11[%c0_13, %c0_14, %c0_15], %12 {strides = array<i32>} : memref<2x1x32xf32, #tpu.memory_space<vmem>>, vector<2x1x32xf32>,
    } else {
    }
    %c0 = arith.constant 0 : index
    %c0_1 = arith.constant 0 : index
    %c0_2 = arith.constant 0 : index
    %3 = vector.load %arg2[%c0, %c0_1, %c0_2] : memref<2x8x32xf32, #tpu.memory_space<vmem>>, vector<2x8x32xf32>
    %cst = arith.constant 1.000000e+00 : f32
    %4 = vector.broadcast %cst : f32 to vector<2x1x8xf32>
    %c0_3 = arith.constant 0 : index
    %c0_4 = arith.constant 0 : index
    %c0_5 = arith.constant 0 : index
    %5 = vector.load %arg11[%c0_3, %c0_4, %c0_5] : memref<2x1x32xf32, #tpu.memory_space<vmem>>, vector<2x1x32xf32>
    "tpu.trace_start"() <{level = 10 : i32, message = "bqs,bsh->bqh"}> : () -> ()
    %cst_6 = arith.constant dense<0.000000e+00> : vector<2x1x32xf32>
    %6 = tpu.matmul %4, %3, %cst_6 {dimension_numbers = #tpu.dot_dimension_numbers<[2], [1], [1], [2], [0, 0, 0, 1, 1, 2], [0], [0]>} : vector<2x1x8xf32>, vector<2x8x32xf32>, vector<2x1x32xf32> -> vector<2x1x32xf32>
    "tpu.trace_stop"() : () -> ()
    %7 = arith.addf %5, %6 : vector<2x1x32xf32>
    %c0_7 = arith.constant 0 : index
    %c0_8 = arith.constant 0 : index
    %c0_9 = arith.constant 0 : index
    %8 = vector.load %arg11[%c0_7, %c0_8, %c0_9] : memref<2x1x32xf32, #tpu.memory_space<vmem>>, vector<2x1x32xf32>
    tpu.vector_store %arg11[%c0_7, %c0_8, %c0_9], %7 {strides = array<i32>} : memref<2x1x32xf32, #tpu.memory_space<vmem>>, vector<2x1x32xf32>,
    %c0_i32_10 = arith.constant 0 : i32
    %9 = arith.cmpi eq, %arg1, %c0_i32_10 : i32
    %10 = arith.extui %9 : i1 to i32
    %c0_i32_11 = arith.constant 0 : i32
    %11 = arith.cmpi ne, %10, %c0_i32_11 : i32
    scf.if %11 {
      %c0_12 = arith.constant 0 : index
      %c0_13 = arith.constant 0 : index
      %c0_14 = arith.constant 0 : index
      %12 = vector.load %arg11[%c0_12, %c0_13, %c0_14] : memref<2x1x32xf32, #tpu.memory_space<vmem>>, vector<2x1x32xf32>
      %13 = vector.shape_cast %12 : vector<2x1x32xf32> to vector<2x32xf32>
      %cst_15 = arith.constant 1.250000e-01 : f32
      %14 = vector.broadcast %cst_15 : f32 to vector<2x32xf32>
      %15 = arith.mulf %13, %14 : vector<2x32xf32>
      %c0_16 = arith.constant 0 : index
      %c0_17 = arith.constant 0 : index
      %16 = vector.load %arg3[%c0_16, %c0_17] : memref<32x24xf32, #tpu.memory_space<vmem>>, vector<32x24xf32>
      %cst_18 = arith.constant dense<0.000000e+00> : vector<2x24xf32>
      %17 = tpu.matmul %15, %16, %cst_18 {dimension_numbers = #tpu.dot_dimension_numbers<[1], [0], [0], [1], [0, 0, 1, 1], [], []>} : vector<2x32xf32>, vector<32x24xf32>, vector<2x24xf32> -> vector<2x24xf32>
      %c0_19 = arith.constant 0 : index
      %c0_20 = arith.constant 0 : index
      %18 = vector.load %arg4[%c0_19, %c0_20] : memref<1x24xf32, #tpu.memory_space<vmem>>, vector<1x24xf32>
      %19 = vector.broadcast %18 : vector<1x24xf32> to vector<2x24xf32>
      %20 = arith.addf %17, %19 : vector<2x24xf32>
      %cst_21 = arith.constant 0.000000e+00 : f32
      %21 = vector.broadcast %cst_21 : f32 to vector<2x24xf32>
      %22 = arith.maximumf %20, %21 : vector<2x24xf32>
      %23 = vector.extract_strided_slice %22 {offsets = [0, 0], sizes = [2, 16], strides = [1, 1]} : vector<2x24xf32> to vector<2x16xf32>
      %24 = vector.extract_strided_slice %22 {offsets = [0, 16], sizes = [2, 8], strides = [1, 1]} : vector<2x24xf32> to vector<2x8xf32>
      %c0_22 = arith.constant 0 : index
      %c0_23 = arith.constant 0 : index
      %25 = vector.load %arg5[%c0_22, %c0_23] : memref<16x8xf32, #tpu.memory_space<vmem>>, vector<16x8xf32>
      %cst_24 = arith.constant dense<0.000000e+00> : vector<2x8xf32>
      %26 = tpu.matmul %23, %25, %cst_24 {dimension_numbers = #tpu.dot_dimension_numbers<[1], [0], [0], [1], [0, 0, 1, 1], [], []>} : vector<2x16xf32>, vector<16x8xf32>, vector<2x8xf32> -> vector<2x8xf32>
      %c0_25 = arith.constant 0 : index
      %c0_26 = arith.constant 0 : index
      %27 = vector.load %arg6[%c0_25, %c0_26] : memref<1x8xf32, #tpu.memory_space<vmem>>, vector<1x8xf32>
      %28 = vector.broadcast %27 : vector<1x8xf32> to vector<2x8xf32>
      %29 = arith.addf %26, %28 : vector<2x8xf32>
      %cst_27 = arith.constant 0.000000e+00 : f32
      %30 = vector.broadcast %cst_27 : f32 to vector<2x8xf32>
      %31 = arith.maximumf %29, %30 : vector<2x8xf32>
      %c0_28 = arith.constant 0 : index
      %c0_29 = arith.constant 0 : index
      %32 = vector.load %arg7[%c0_28, %c0_29] : memref<8x128xf32, #tpu.memory_space<vmem>>, vector<8x128xf32>
      %cst_30 = arith.constant dense<0.000000e+00> : vector<2x128xf32>
      %33 = tpu.matmul %31, %32, %cst_30 {dimension_numbers = #tpu.dot_dimension_numbers<[1], [0], [0], [1], [0, 0, 1, 1], [], []>} : vector<2x8xf32>, vector<8x128xf32>, vector<2x128xf32> -> vector<2x128xf32>
      %c0_31 = arith.constant 0 : index
      %c0_32 = arith.constant 0 : index
      %34 = vector.load %arg8[%c0_31, %c0_32] : memref<8x128xf32, #tpu.memory_space<vmem>>, vector<8x128xf32>
      %cst_33 = arith.constant dense<0.000000e+00> : vector<2x128xf32>
      %35 = tpu.matmul %24, %34, %cst_33 {dimension_numbers = #tpu.dot_dimension_numbers<[1], [0], [0], [1], [0, 0, 1, 1], [], []>} : vector<2x8xf32>, vector<8x128xf32>, vector<2x128xf32> -> vector<2x128xf32>
      %36 = arith.addf %33, %35 : vector<2x128xf32>
      %c0_34 = arith.constant 0 : index
      %c0_35 = arith.constant 0 : index
      %37 = vector.load %arg9[%c0_34, %c0_35] : memref<1x128xf32, #tpu.memory_space<vmem>>, vector<1x128xf32>
      %38 = vector.broadcast %37 : vector<1x128xf32> to vector<2x128xf32>
      %39 = arith.addf %36, %38 : vector<2x128xf32>
      %40 = tpu.iota {dimensions = array<i32: 1>} : vector<2x128xi32>
      %c3_i32 = arith.constant 3 : i32
      %41 = vector.broadcast %c3_i32 : i32 to vector<2x128xi32>
      %42 = arith.cmpi eq, %40, %41 : vector<2x128xi32>
      %43 = arith.negf %39 : vector<2x128xf32>
      %44 = math.exp %43 : vector<2x128xf32>
      %cst_36 = arith.constant 1.000000e+00 : f32
      %45 = vector.broadcast %cst_36 : f32 to vector<2x128xf32>
      %46 = arith.addf %45, %44 : vector<2x128xf32>
      %47 = arith.divf %45, %46 : vector<2x128xf32>
      %48 = arith.select %42, %47, %39 : vector<2x128xi1>, vector<2x128xf32>
      %c0_37 = arith.constant 0 : index
      %c0_38 = arith.constant 0 : index
      %49 = vector.load %arg10[%c0_37, %c0_38] : memref<2x128xf32, #tpu.memory_space<vmem>>, vector<2x128xf32>
      tpu.vector_store %arg10[%c0_37, %c0_38], %48 {strides = array<i32>} : memref<2x128xf32, #tpu.memory_space<vmem>>, vector<2x128xf32>,
    } else {
    }
    return
  }
  func.func @transform_0(%arg0: i32, %arg1: i32) -> (i32, i32, i32) {
    %c0_i32 = arith.constant 0 : i32
    %c0_i32_0 = arith.constant 0 : i32
    return %arg0, %arg1, %c0_i32 : i32, i32, i32
  }
  func.func @transform_1(%arg0: i32, %arg1: i32) -> (i32, i32) {
    %c0_i32 = arith.constant 0 : i32
    %c0_i32_0 = arith.constant 0 : i32
    %c0_i32_1 = arith.constant 0 : i32
    return %c0_i32, %c0_i32_0 : i32, i32
  }
  func.func @transform_2(%arg0: i32, %arg1: i32) -> (i32, i32) {
    %c0_i32 = arith.constant 0 : i32
    %c0_i32_0 = arith.constant 0 : i32
    %c0_i32_1 = arith.constant 0 : i32
    return %c0_i32, %c0_i32_0 : i32, i32
  }
  func.func @transform_3(%arg0: i32, %arg1: i32) -> (i32, i32) {
    %c0_i32 = arith.constant 0 : i32
    %c0_i32_0 = arith.constant 0 : i32
    %c0_i32_1 = arith.constant 0 : i32
    return %c0_i32, %c0_i32_0 : i32, i32
  }
  func.func @transform_4(%arg0: i32, %arg1: i32) -> (i32, i32) {
    %c0_i32 = arith.constant 0 : i32
    %c0_i32_0 = arith.constant 0 : i32
    %c0_i32_1 = arith.constant 0 : i32
    return %c0_i32, %c0_i32_0 : i32, i32
  }
  func.func @transform_5(%arg0: i32, %arg1: i32) -> (i32, i32) {
    %c0_i32 = arith.constant 0 : i32
    %c0_i32_0 = arith.constant 0 : i32
    %c0_i32_1 = arith.constant 0 : i32
    return %c0_i32, %c0_i32_0 : i32, i32
  }
  func.func @transform_6(%arg0: i32, %arg1: i32) -> (i32, i32) {
    %c0_i32 = arith.constant 0 : i32
    %c0_i32_0 = arith.constant 0 : i32
    %c0_i32_1 = arith.constant 0 : i32
    return %c0_i32, %c0_i32_0 : i32, i32
  }
  func.func @transform_7(%arg0: i32, %arg1: i32) -> (i32, i32) {
    %c0_i32 = arith.constant 0 : i32
    %c0_i32_0 = arith.constant 0 : i32
    %c0_i32_1 = arith.constant 0 : i32
    return %c0_i32, %c0_i32_0 : i32, i32
  }
  func.func @transform_8(%arg0: i32, %arg1: i32) -> (i32, i32) {
    %c0_i32 = arith.constant 0 : i32
    %c0_i32_0 = arith.constant 0 : i32
    return %arg0, %c0_i32 : i32, i32
  }
}

module attributes {stable_mosaic.version = 11 : i64} {
  func.func @_anomaly_head_kernel(%arg0: i32, %arg1: i32, %arg2: memref<2x8x32xf32, #tpu.memory_space<vmem>>, %arg3: memref<32x24xf32, #tpu.memory_space<vmem>>, %arg4: memref<1x24xf32, #tpu.memory_space<vmem>>, %arg5: memref<16x8xf32, #tpu.memory_space<vmem>>, %arg6: memref<1x8xf32, #tpu.memory_space<vmem>>, %arg7: memref<8x128xf32, #tpu.memory_space<vmem>>, %arg8: memref<8x128xf32, #tpu.memory_space<vmem>>, %arg9: memref<1x128xf32, #tpu.memory_space<vmem>>, %arg10: memref<2x128xf32, #tpu.memory_space<vmem>>, %arg11: memref<2x1x32xf32, #tpu.memory_space<vmem>>) attributes {dimension_semantics = [#tpu.dimension_semantics<parallel>, #tpu.dimension_semantics<arbitrary>], iteration_bounds = array<i64: 1, 1>, scalar_prefetch = 0 : i64, scratch_operands = 1 : i64, tpu.core_type = #tpu.core_type<tc>, window_params = [{transform_indices = @transform_0, window_bounds = array<i64: 2, 8, 32>}, {pipeline_mode = #tpu.pipeline_mode<synchronous>, transform_indices = @transform_1, window_bounds = array<i64: 32, 24>}, {pipeline_mode = #tpu.pipeline_mode<synchronous>, transform_indices = @transform_2, window_bounds = array<i64: 1, 24>}, {pipeline_mode = #tpu.pipeline_mode<synchronous>, transform_indices = @transform_3, window_bounds = array<i64: 16, 8>}, {pipeline_mode = #tpu.pipeline_mode<synchronous>, transform_indices = @transform_4, window_bounds = array<i64: 1, 8>}, {pipeline_mode = #tpu.pipeline_mode<synchronous>, transform_indices = @transform_5, window_bounds = array<i64: 8, 128>}, {pipeline_mode = #tpu.pipeline_mode<synchronous>, transform_indices = @transform_6, window_bounds = array<i64: 8, 128>}, {pipeline_mode = #tpu.pipeline_mode<synchronous>, transform_indices = @transform_7, window_bounds = array<i64: 1, 128>}, {transform_indices = @transform_8, window_bounds = array<i64: 2, 128>}]} {
    %c0_i32 = arith.constant 0 : i32
    %0 = arith.cmpi eq, %arg1, %c0_i32 : i32
    %1 = arith.extui %0 : i1 to i32
    %c0_i32_0 = arith.constant 0 : i32
    %2 = arith.cmpi ne, %1, %c0_i32_0 : i32
    scf.if %2 {
      %cst_12 = arith.constant 0.000000e+00 : f32
      %12 = vector.broadcast %cst_12 : f32 to vector<2x1x32xf32>
      %c0_13 = arith.constant 0 : index
      %c0_14 = arith.constant 0 : index
      %c0_15 = arith.constant 0 : index
      %13 = vector.load %arg11[%c0_13, %c0_14, %c0_15] : memref<2x1x32xf32, #tpu.memory_space<vmem>>, vector<2x1x32xf32>
      tpu.vector_store %arg11[%c0_13, %c0_14, %c0_15], %12 {strides = array<i32>} : memref<2x1x32xf32, #tpu.memory_space<vmem>>, vector<2x1x32xf32>,
    } else {
    }
    %c0 = arith.constant 0 : index
    %c0_1 = arith.constant 0 : index
    %c0_2 = arith.constant 0 : index
    %3 = vector.load %arg2[%c0, %c0_1, %c0_2] : memref<2x8x32xf32, #tpu.memory_space<vmem>>, vector<2x8x32xf32>
    %cst = arith.constant 1.000000e+00 : f32
    %4 = vector.broadcast %cst : f32 to vector<2x1x8xf32>
    %c0_3 = arith.constant 0 : index
    %c0_4 = arith.constant 0 : index
    %c0_5 = arith.constant 0 : index
    %5 = vector.load %arg11[%c0_3, %c0_4, %c0_5] : memref<2x1x32xf32, #tpu.memory_space<vmem>>, vector<2x1x32xf32>
    "tpu.trace_start"() <{level = 10 : i32, message = "bqs,bsh->bqh"}> : () -> ()
    %cst_6 = arith.constant dense<0.000000e+00> : vector<2x1x32xf32>
    %6 = tpu.matmul %4, %3, %cst_6 {dimension_numbers = #tpu.dot_dimension_numbers<[2], [1], [1], [2], [0, 0, 0, 1, 1, 2], [0], [0]>} : vector<2x1x8xf32>, vector<2x8x32xf32>, vector<2x1x32xf32> -> vector<2x1x32xf32>
    "tpu.trace_stop"() : () -> ()
    %7 = arith.addf %5, %6 : vector<2x1x32xf32>
    %c0_7 = arith.constant 0 : index
    %c0_8 = arith.constant 0 : index
    %c0_9 = arith.constant 0 : index
    %8 = vector.load %arg11[%c0_7, %c0_8, %c0_9] : memref<2x1x32xf32, #tpu.memory_space<vmem>>, vector<2x1x32xf32>
    tpu.vector_store %arg11[%c0_7, %c0_8, %c0_9], %7 {strides = array<i32>} : memref<2x1x32xf32, #tpu.memory_space<vmem>>, vector<2x1x32xf32>,
    %c0_i32_10 = arith.constant 0 : i32
    %9 = arith.cmpi eq, %arg1, %c0_i32_10 : i32
    %10 = arith.extui %9 : i1 to i32
    %c0_i32_11 = arith.constant 0 : i32
    %11 = arith.cmpi ne, %10, %c0_i32_11 : i32
    scf.if %11 {
      %c0_12 = arith.constant 0 : index
      %c0_13 = arith.constant 0 : index
      %c0_14 = arith.constant 0 : index
      %12 = vector.load %arg11[%c0_12, %c0_13, %c0_14] : memref<2x1x32xf32, #tpu.memory_space<vmem>>, vector<2x1x32xf32>
      %13 = vector.shape_cast %12 : vector<2x1x32xf32> to vector<2x32xf32>
      %cst_15 = arith.constant 1.250000e-01 : f32
      %14 = vector.broadcast %cst_15 : f32 to vector<2x32xf32>
      %15 = arith.mulf %13, %14 : vector<2x32xf32>
      %c0_16 = arith.constant 0 : index
      %c0_17 = arith.constant 0 : index
      %16 = vector.load %arg3[%c0_16, %c0_17] : memref<32x24xf32, #tpu.memory_space<vmem>>, vector<32x24xf32>
      %cst_18 = arith.constant dense<0.000000e+00> : vector<2x24xf32>
      %17 = tpu.matmul %15, %16, %cst_18 {dimension_numbers = #tpu.dot_dimension_numbers<[1], [0], [0], [1], [0, 0, 1, 1], [], []>} : vector<2x32xf32>, vector<32x24xf32>, vector<2x24xf32> -> vector<2x24xf32>
      %c0_19 = arith.constant 0 : index
      %c0_20 = arith.constant 0 : index
      %18 = vector.load %arg4[%c0_19, %c0_20] : memref<1x24xf32, #tpu.memory_space<vmem>>, vector<1x24xf32>
      %19 = vector.broadcast %18 : vector<1x24xf32> to vector<2x24xf32>
      %20 = arith.addf %17, %19 : vector<2x24xf32>
      %cst_21 = arith.constant 0.000000e+00 : f32
      %21 = vector.broadcast %cst_21 : f32 to vector<2x24xf32>
      %22 = arith.maximumf %20, %21 : vector<2x24xf32>
      %23 = vector.extract_strided_slice %22 {offsets = [0, 0], sizes = [2, 16], strides = [1, 1]} : vector<2x24xf32> to vector<2x16xf32>
      %24 = vector.extract_strided_slice %22 {offsets = [0, 16], sizes = [2, 8], strides = [1, 1]} : vector<2x24xf32> to vector<2x8xf32>
      %c0_22 = arith.constant 0 : index
      %c0_23 = arith.constant 0 : index
      %25 = vector.load %arg5[%c0_22, %c0_23] : memref<16x8xf32, #tpu.memory_space<vmem>>, vector<16x8xf32>
      %cst_24 = arith.constant dense<0.000000e+00> : vector<2x8xf32>
      %26 = tpu.matmul %23, %25, %cst_24 {dimension_numbers = #tpu.dot_dimension_numbers<[1], [0], [0], [1], [0, 0, 1, 1], [], []>} : vector<2x16xf32>, vector<16x8xf32>, vector<2x8xf32> -> vector<2x8xf32>
      %c0_25 = arith.constant 0 : index
      %c0_26 = arith.constant 0 : index
      %27 = vector.load %arg6[%c0_25, %c0_26] : memref<1x8xf32, #tpu.memory_space<vmem>>, vector<1x8xf32>
      %28 = vector.broadcast %27 : vector<1x8xf32> to vector<2x8xf32>
      %29 = arith.addf %26, %28 : vector<2x8xf32>
      %cst_27 = arith.constant 0.000000e+00 : f32
      %30 = vector.broadcast %cst_27 : f32 to vector<2x8xf32>
      %31 = arith.maximumf %29, %30 : vector<2x8xf32>
      %c0_28 = arith.constant 0 : index
      %c0_29 = arith.constant 0 : index
      %32 = vector.load %arg7[%c0_28, %c0_29] : memref<8x128xf32, #tpu.memory_space<vmem>>, vector<8x128xf32>
      %cst_30 = arith.constant dense<0.000000e+00> : vector<2x128xf32>
      %33 = tpu.matmul %31, %32, %cst_30 {dimension_numbers = #tpu.dot_dimension_numbers<[1], [0], [0], [1], [0, 0, 1, 1], [], []>} : vector<2x8xf32>, vector<8x128xf32>, vector<2x128xf32> -> vector<2x128xf32>
      %c0_31 = arith.constant 0 : index
      %c0_32 = arith.constant 0 : index
      %34 = vector.load %arg8[%c0_31, %c0_32] : memref<8x128xf32, #tpu.memory_space<vmem>>, vector<8x128xf32>
      %cst_33 = arith.constant dense<0.000000e+00> : vector<2x128xf32>
      %35 = tpu.matmul %24, %34, %cst_33 {dimension_numbers = #tpu.dot_dimension_numbers<[1], [0], [0], [1], [0, 0, 1, 1], [], []>} : vector<2x8xf32>, vector<8x128xf32>, vector<2x128xf32> -> vector<2x128xf32>
      %36 = arith.addf %33, %35 : vector<2x128xf32>
      %c0_34 = arith.constant 0 : index
      %c0_35 = arith.constant 0 : index
      %37 = vector.load %arg9[%c0_34, %c0_35] : memref<1x128xf32, #tpu.memory_space<vmem>>, vector<1x128xf32>
      %38 = vector.broadcast %37 : vector<1x128xf32> to vector<2x128xf32>
      %39 = arith.addf %36, %38 : vector<2x128xf32>
      %40 = tpu.iota {dimensions = array<i32: 1>} : vector<2x128xi32>
      %c3_i32 = arith.constant 3 : i32
      %41 = vector.broadcast %c3_i32 : i32 to vector<2x128xi32>
      %42 = arith.cmpi eq, %40, %41 : vector<2x128xi32>
      %43 = arith.negf %39 : vector<2x128xf32>
      %44 = math.exp %43 : vector<2x128xf32>
      %cst_36 = arith.constant 1.000000e+00 : f32
      %45 = vector.broadcast %cst_36 : f32 to vector<2x128xf32>
      %46 = arith.addf %45, %44 : vector<2x128xf32>
      %47 = arith.divf %45, %46 : vector<2x128xf32>
      %48 = arith.select %42, %47, %39 : vector<2x128xi1>, vector<2x128xf32>
      %c0_37 = arith.constant 0 : index
      %c0_38 = arith.constant 0 : index
      %49 = vector.load %arg10[%c0_37, %c0_38] : memref<2x128xf32, #tpu.memory_space<vmem>>, vector<2x128xf32>
      tpu.vector_store %arg10[%c0_37, %c0_38], %48 {strides = array<i32>} : memref<2x128xf32, #tpu.memory_space<vmem>>, vector<2x128xf32>,
    } else {
    }
    return
  }
  func.func @transform_0(%arg0: i32, %arg1: i32) -> (i32, i32, i32) {
    %c0_i32 = arith.constant 0 : i32
    %c0_i32_0 = arith.constant 0 : i32
    return %arg0, %arg1, %c0_i32 : i32, i32, i32
  }
  func.func @transform_1(%arg0: i32, %arg1: i32) -> (i32, i32) {
    %c0_i32 = arith.constant 0 : i32
    %c0_i32_0 = arith.constant 0 : i32
    %c0_i32_1 = arith.constant 0 : i32
    return %c0_i32, %c0_i32_0 : i32, i32
  }
  func.func @transform_2(%arg0: i32, %arg1: i32) -> (i32, i32) {
    %c0_i32 = arith.constant 0 : i32
    %c0_i32_0 = arith.constant 0 : i32
    %c0_i32_1 = arith.constant 0 : i32
    return %c0_i32, %c0_i32_0 : i32, i32
  }
  func.func @transform_3(%arg0: i32, %arg1: i32) -> (i32, i32) {
    %c0_i32 = arith.constant 0 : i32
    %c0_i32_0 = arith.constant 0 : i32
    %c0_i32_1 = arith.constant 0 : i32
    return %c0_i32, %c0_i32_0 : i32, i32
  }
  func.func @transform_4(%arg0: i32, %arg1: i32) -> (i32, i32) {
    %c0_i32 = arith.constant 0 : i32
    %c0_i32_0 = arith.constant 0 : i32
    %c0_i32_1 = arith.constant 0 : i32
    return %c0_i32, %c0_i32_0 : i32, i32
  }
  func.func @transform_5(%arg0: i32, %arg1: i32) -> (i32, i32) {
    %c0_i32 = arith.constant 0 : i32
    %c0_i32_0 = arith.constant 0 : i32
    %c0_i32_1 = arith.constant 0 : i32
    return %c0_i32, %c0_i32_0 : i32, i32
  }
  func.func @transform_6(%arg0: i32, %arg1: i32) -> (i32, i32) {
    %c0_i32 = arith.constant 0 : i32
    %c0_i32_0 = arith.constant 0 : i32
    %c0_i32_1 = arith.constant 0 : i32
    return %c0_i32, %c0_i32_0 : i32, i32
  }
  func.func @transform_7(%arg0: i32, %arg1: i32) -> (i32, i32) {
    %c0_i32 = arith.constant 0 : i32
    %c0_i32_0 = arith.constant 0 : i32
    %c0_i32_1 = arith.constant 0 : i32
    return %c0_i32, %c0_i32_0 : i32, i32
  }
  func.func @transform_8(%arg0: i32, %arg1: i32) -> (i32, i32) {
    %c0_i32 = arith.constant 0 : i32
    %c0_i32_0 = arith.constant 0 : i32
    return %arg0, %c0_i32 : i32, i32
  }
}

</mosaic_0001>

<llo_original>
// kernel: tpu_custom_call.1
$region0: #{tpu_custom_call.1}
  #allocation0 [shape = 'u32[]', space=smem, size = 0x4, offset = 0x4, fixed_abs, tag = 'smem constant byte address 0x4 - core index']
  #allocation1 [shape = 'u32[144,128]{1,0:T(1,128)}', space=vmem, size = 0x12000, scoped, tag = 'internal scratch']
  #allocation2 [shape = 'f32[2,1,32]{2,1,0:T(1,128)}', space=vmem, size = 0x400, scoped, tag = 'scratch operand']
  %s0 = inlined_call_operand.vmem [shape: f32[2,8,32], index: 0, kind: input, shape index: {}]
  %s1 = inlined_call_operand.vmem [shape: f32[32,24], index: 1, kind: input, shape index: {}]
  %s2 = inlined_call_operand.vmem [shape: f32[1,24], index: 2, kind: input, shape index: {}]
  %s3 = inlined_call_operand.vmem [shape: f32[16,8], index: 3, kind: input, shape index: {}]
  %s4 = inlined_call_operand.vmem [shape: f32[1,8], index: 4, kind: input, shape index: {}]
  %s5 = inlined_call_operand.vmem [shape: f32[8,128], index: 5, kind: input, shape index: {}]
  %s6 = inlined_call_operand.vmem [shape: f32[8,128], index: 6, kind: input, shape index: {}]
  %s7 = inlined_call_operand.vmem [shape: f32[1,128], index: 7, kind: input, shape index: {}]
  %s8 = inlined_call_operand.hbm [shape: f32[2,128], index: 8, kind: output, shape index: {}]
  %s9 = sld [smem:[#allocation0]]
  $region50: #{tpu_custom_call.1} parent=0
    _
  %s11 = ssub.s32 1, %s9
  %s12 = scalar_select 0, %s11, %s9
  $region1: #{tpu_custom_call.1} parent=0
    #allocation3 [shape = 'u8[1024]{0}', space=vmem, size = 0x400, scoped, tag = 'output window, operand 0, single buffered']
    #allocation4 [shape = 's32[1]{0}', space=sflag, size = 0x4, scoped, tag = 'scoped memory for tpu_custom_call.1']
    %13 = vsyncpa [#allocation4], 0
    // Predicated region
    $region2: #{tpu_custom_call.1} parent=1 // pred_check
      _
    $region3: #{tpu_custom_call.1} parent=1 // pred_check_branch
      %15 = sbr.rel (0) target = $region5
    $region4: #{tpu_custom_call.1} parent=1 // pred_region
      _
    $region5: #{tpu_custom_call.1} parent=1 // pred_fallthru
      _
    // Predicated region
    $region6: #{tpu_custom_call.1} parent=1 // pred_check
      _
    $region7: #{tpu_custom_call.1} parent=1 // pred_check_branch
      %17 = sbr.rel (0) target = $region9
    $region8: #{tpu_custom_call.1} parent=1 // pred_region
      _
    $region9: #{tpu_custom_call.1} parent=1 // pred_fallthru
      _
    // Predicated region
    $region10: #{tpu_custom_call.1} parent=1 // pred_check
      _
    $region11: #{tpu_custom_call.1} parent=1 // pred_check_branch
      %19 = sbr.rel (0) target = $region13
    $region12: #{tpu_custom_call.1} parent=1 // pred_region
      _
    $region13: #{tpu_custom_call.1} parent=1 // pred_fallthru
      _
    // Predicated region
    $region14: #{tpu_custom_call.1} parent=1 // pred_check
      _
    $region15: #{tpu_custom_call.1} parent=1 // pred_check_branch
      %21 = sbr.rel (0) target = $region17
    $region16: #{tpu_custom_call.1} parent=1 // pred_region
      _
    $region17: #{tpu_custom_call.1} parent=1 // pred_fallthru
      _
    // Predicated region
    $region18: #{tpu_custom_call.1} parent=1 // pred_check
      _
    $region19: #{tpu_custom_call.1} parent=1 // pred_check_branch
      %23 = sbr.rel (0) target = $region21
    $region20: #{tpu_custom_call.1} parent=1 // pred_region
      _
    $region21: #{tpu_custom_call.1} parent=1 // pred_fallthru
      _
    // Predicated region
    $region22: #{tpu_custom_call.1} parent=1 // pred_check
      _
    $region23: #{tpu_custom_call.1} parent=1 // pred_check_branch
      %25 = sbr.rel (0) target = $region25
    $region24: #{tpu_custom_call.1} parent=1 // pred_region
      _
    $region25: #{tpu_custom_call.1} parent=1 // pred_fallthru
      _
    // Predicated region
    $region26: #{tpu_custom_call.1} parent=1 // pred_check
      _
    $region27: #{tpu_custom_call.1} parent=1 // pred_check_branch
      %27 = sbr.rel (0) target = $region29
    $region28: #{tpu_custom_call.1} parent=1 // pred_region
      _
    $region29: #{tpu_custom_call.1} parent=1 // pred_fallthru
      _
    // Predicated region
    $region30: #{tpu_custom_call.1} parent=1 // pred_check
      _
    $region31: #{tpu_custom_call.1} parent=1 // pred_check_branch
      %29 = sbr.rel (0) target = $region33
    $region32: #{tpu_custom_call.1} parent=1 // pred_region
      _
    $region33: #{tpu_custom_call.1} parent=1 // pred_fallthru
      _
    %p30 = scmp.eq.s32.totalorder 0, 0
    // Predicated region
    $region34: #{tpu_custom_call.1} parent=1 // pred_check
      %p31 = pneg %p30
    $region35: #{tpu_custom_call.1} parent=1 // pred_check_branch
      %33 = sbr.rel (%p31) target = $region37
    $region36: #{tpu_custom_call.1} parent=1 // pred_region
      %vm34 = vcmask 253952
      %35 = vst.msk [vmem:[#allocation2] sm:$0x1] %vm34, 0.0
      %36 = vst.msk [vmem:[#allocation2 + $0x1] sm:$0x1] %vm34, 0.0
    $region37: #{tpu_custom_call.1} parent=1 // pred_fallthru
      _
    %v37 = vld [vmem:[%s0] sm:$0xff]
    %v38 = vld [vmem:[%s0 + $0x8] sm:$0xff]
    %v39 = vld [vmem:[#allocation2] sm:$0x1]
    %v40 = vld [vmem:[#allocation2 + $0x1] sm:$0x1]
    %vm41 = vcmask 64512
    %v43 = vsel %vm41, 1.0, 0
    %45 = vmatprep.subr.mxu0 0.0
    %46 = vmatpush1.msra.mxu0 %v37
    %47 = vmatprep.subr.mxu0 0.0
    %48 = vmatpush1.msra.mxu0 0.0
    %49 = vmatprep.subr.mxu0 0.0
    %50 = vmatpush1.msra.mxu0 0.0
    %51 = vmatprep.subr.mxu0 0.0
    %52 = vmatpush1.msra.mxu0 0.0
    %53 = vmatprep.subr.mxu0 0.0
    %54 = vmatpush1.msra.mxu0 0.0
    %55 = vmatprep.subr.mxu0 0.0
    %56 = vmatpush1.msra.mxu0 0.0
    %57 = vmatprep.subr.mxu0 0.0
    %58 = vmatpush1.msra.mxu0 0.0
    %59 = vmatprep.subr.mxu0 0.0
    %60 = vmatpush1.msra.mxu0 0.0
    %61 = vmatprep.subr.mxu0 0.0
    %62 = vmatpush1.msra.mxu0 0.0
    %63 = vmatprep.subr.mxu0 0.0
    %64 = vmatpush1.msra.mxu0 0.0
    %65 = vmatprep.subr.mxu0 0.0
    %66 = vmatpush1.msra.mxu0 0.0
    %67 = vmatprep.subr.mxu0 0.0
    %68 = vmatpush1.msra.mxu0 0.0
    %69 = vmatprep.subr.mxu0 0.0
    %70 = vmatpush1.msra.mxu0 0.0
    %71 = vmatprep.subr.mxu0 0.0
    %72 = vmatpush1.msra.mxu0 0.0
    %73 = vmatprep.subr.mxu0 0.0
    %74 = vmatpush1.msra.mxu0 0.0
    %75 = vmatprep.subr.mxu0 0.0
    %76 = vmatpush1.msra.mxu0 0.0
    %77 = vmatprep.subr.mxu0 0.0
    %78 = vmatpush1.msra.mxu0 0.0
    %79 = vmatprep.subr.mxu0 0.0
    %80 = vmatpush1.msra.mxu0 0.0
    %81 = vmatprep.subr.mxu0 0.0
    %82 = vmatpush1.msra.mxu0 0.0
    %83 = vmatprep.subr.mxu0 0.0
    %84 = vmatpush1.msra.mxu0 0.0
    %85 = vmatprep.subr.mxu0 0.0
    %86 = vmatpush1.msra.mxu0 0.0
    %87 = vmatprep.subr.mxu0 0.0
    %88 = vmatpush1.msra.mxu0 0.0
    %89 = vmatprep.subr.mxu0 0.0
    %90 = vmatpush1.msra.mxu0 0.0
    %91 = vmatprep.subr.mxu0 0.0
    %92 = vmatpush1.msra.mxu0 0.0
    %93 = vmatprep.subr.mxu0 0.0
    %94 = vmatpush1.msra.mxu0 0.0
    %95 = vmatprep.subr.mxu0 0.0
    %96 = vmatpush1.msra.mxu0 0.0
    %97 = vmatprep.subr.mxu0 0.0
    %98 = vmatpush1.msra.mxu0 0.0
    %99 = vmatprep.subr.mxu0 0.0
    %100 = vmatpush1.msra.mxu0 0.0
    %101 = vmatprep.subr.mxu0 0.0
    %102 = vmatpush1.msra.mxu0 0.0
    %103 = vmatprep.subr.mxu0 0.0
    %104 = vmatpush1.msra.mxu0 0.0
    %105 = vmatprep.subr.mxu0 0.0
    %106 = vmatpush1.msra.mxu0 0.0
    %107 = vmatprep.subr.mxu0 0.0
    %108 = vmatpush1.msra.mxu0 0.0
    %109 = vmatprep.mubr.f32.mxu0 0.0
    %110 = vmatmul.mubr.f32.gmra.mrb[0].mxu0 %v43
    %v111 = vpop.f32.mrb[0].mxu0
    %v112 = vadd.f32 0.0, %v111
    %v113 = vpop.f32.mrb[0].mxu0
    %114 = vdwg.mxu0
    %115 = vmatprep.subr.mxu0 0.0
    %116 = vmatpush1.msra.mxu0 %v38
    %117 = vmatprep.subr.mxu0 0.0
    %118 = vmatpush1.msra.mxu0 0.0
    %119 = vmatprep.subr.mxu0 0.0
    %120 = vmatpush1.msra.mxu0 0.0
    %121 = vmatprep.subr.mxu0 0.0
    %122 = vmatpush1.msra.mxu0 0.0
    %123 = vmatprep.subr.mxu0 0.0
    %124 = vmatpush1.msra.mxu0 0.0
    %125 = vmatprep.subr.mxu0 0.0
    %126 = vmatpush1.msra.mxu0 0.0
    %127 = vmatprep.subr.mxu0 0.0
    %128 = vmatpush1.msra.mxu0 0.0
    %129 = vmatprep.subr.mxu0 0.0
    %130 = vmatpush1.msra.mxu0 0.0
    %131 = vmatprep.subr.mxu0 0.0
    %132 = vmatpush1.msra.mxu0 0.0
    %133 = vmatprep.subr.mxu0 0.0
    %134 = vmatpush1.msra.mxu0 0.0
    %135 = vmatprep.subr.mxu0 0.0
    %136 = vmatpush1.msra.mxu0 0.0
    %137 = vmatprep.subr.mxu0 0.0
    %138 = vmatpush1.msra.mxu0 0.0
    %139 = vmatprep.subr.mxu0 0.0
    %140 = vmatpush1.msra.mxu0 0.0
    %141 = vmatprep.subr.mxu0 0.0
    %142 = vmatpush1.msra.mxu0 0.0
    %143 = vmatprep.subr.mxu0 0.0
    %144 = vmatpush1.msra.mxu0 0.0
    %145 = vmatprep.subr.mxu0 0.0
    %146 = vmatpush1.msra.mxu0 0.0
    %147 = vmatprep.subr.mxu0 0.0
    %148 = vmatpush1.msra.mxu0 0.0
    %149 = vmatprep.subr.mxu0 0.0
    %150 = vmatpush1.msra.mxu0 0.0
    %151 = vmatprep.subr.mxu0 0.0
    %152 = vmatpush1.msra.mxu0 0.0
    %153 = vmatprep.subr.mxu0 0.0
    %154 = vmatpush1.msra.mxu0 0.0
    %155 = vmatprep.subr.mxu0 0.0
    %156 = vmatpush1.msra.mxu0 0.0
    %157 = vmatprep.subr.mxu0 0.0
    %158 = vmatpush1.msra.mxu0 0.0
    %159 = vmatprep.subr.mxu0 0.0
    %160 = vmatpush1.msra.mxu0 0.0
    %161 = vmatprep.subr.mxu0 0.0
    %162 = vmatpush1.msra.mxu0 0.0
    %163 = vmatprep.subr.mxu0 0.0
    %164 = vmatpush1.msra.mxu0 0.0
    %165 = vmatprep.subr.mxu0 0.0
    %166 = vmatpush1.msra.mxu0 0.0
    %167 = vmatprep.subr.mxu0 0.0
    %168 = vmatpush1.msra.mxu0 0.0
    %169 = vmatprep.subr.mxu0 0.0
    %170 = vmatpush1.msra.mxu0 0.0
    %171 = vmatprep.subr.mxu0 0.0
    %172 = vmatpush1.msra.mxu0 0.0
    %173 = vmatprep.subr.mxu0 0.0
    %174 = vmatpush1.msra.mxu0 0.0
    %175 = vmatprep.subr.mxu0 0.0
    %176 = vmatpush1.msra.mxu0 0.0
    %177 = vmatprep.subr.mxu0 0.0
    %178 = vmatpush1.msra.mxu0 0.0
    %179 = vmatprep.mubr.f32.mxu0 0.0
    %180 = vmatmul.mubr.f32.gmra.mrb[0].mxu0 %v43
    %v181 = vpop.f32.mrb[0].mxu0
    %v182 = vadd.f32 0.0, %v181
    %v183 = vpop.f32.mrb[0].mxu0
    %184 = vdwg.mxu0
    %v185 = vadd.f32 %v39, %v112
    %v186 = vadd.f32 %v40, %v182
    %vm187 = vcmask 253952
    %188 = vst.msk [vmem:[#allocation2] sm:$0x1] %vm187, %v185
    %189 = vst.msk [vmem:[#allocation2 + $0x1] sm:$0x1] %vm187, %v186
    // Predicated region
    $region38: #{tpu_custom_call.1} parent=1 // pred_check
      %p190 = pneg %p30
    $region39: #{tpu_custom_call.1} parent=1 // pred_check_branch
      %192 = sbr.rel (%p190) target = $region41
    $region40: #{tpu_custom_call.1} parent=1 // pred_region
      %v193 = vld [vmem:[#allocation2] sm:$0x1]
      %v194 = vld [vmem:[#allocation2 + $0x1] sm:$0x1]
      %v195 = vmul.f32 %v193, 0.125
      %v196 = vmul.f32 %v194, 0.125
      %v197 = vld [vmem:[%s1] sm:$0xff]
      %v198 = vld [vmem:[%s1 + $0x8] sm:$0xff]
      %v199 = vld [vmem:[%s1 + $0x10] sm:$0xff]
      %v200 = vld [vmem:[%s1 + $0x18] sm:$0xff]
      %v201 = vld [vmem:[%s2] sm:$0x1]
      %v203 = vlaneseq
      %v204 = vshrl.u32 %v203, 7
      %v205 = vsub.s32 0, %v204
      %v206 = vrot.slane %v201, %v205
      %v210 = vcombine.low %v195, %v196
      %v212 = vunpack.c.l.s4 1966171168
      %v213 = vunpack.c.0.s8 %v212
      %v214 = vlaneseq
      %v215 = vshrl.u32 %v214, 7
      %v216 = vsub.s32 %v213, %v215
      %v217 = vrot.slane %v210, %v216
      %v219 = vunpack.c.l.s4 1966171168
      %v220 = vunpack.c.0.s8 %v219
      %v221 = vlaneseq
      %v222 = vshrl.u32 %v221, 7
      %v223 = vsub.s32 %v220, %v222
      %v224 = vrot.slane %v217, %v223
      %vm225 = vcmask 261120
      %v226 = vsel %vm225, %v224, 0
      %228 = vmatprep.subr.mxu0 0.0
      %229 = vmatpush1.msra.mxu0 %v197
      %230 = vmatprep.subr.mxu0 0.0
      %231 = vmatpush1.msra.mxu0 %v198
      %232 = vmatprep.subr.mxu0 0.0
      %233 = vmatpush1.msra.mxu0 %v199
      %234 = vmatprep.subr.mxu0 0.0
      %235 = vmatpush1.msra.mxu0 %v200
      %236 = vmatprep.subr.mxu0 0.0
      %237 = vmatpush1.msra.mxu0 0.0
      %238 = vmatprep.subr.mxu0 0.0
      %239 = vmatpush1.msra.mxu0 0.0
      %240 = vmatprep.subr.mxu0 0.0
      %241 = vmatpush1.msra.mxu0 0.0
      %242 = vmatprep.subr.mxu0 0.0
      %243 = vmatpush1.msra.mxu0 0.0
      %244 = vmatprep.subr.mxu0 0.0
      %245 = vmatpush1.msra.mxu0 0.0
      %246 = vmatprep.subr.mxu0 0.0
      %247 = vmatpush1.msra.mxu0 0.0
      %248 = vmatprep.subr.mxu0 0.0
      %249 = vmatpush1.msra.mxu0 0.0
      %250 = vmatprep.subr.mxu0 0.0
      %251 = vmatpush1.msra.mxu0 0.0
      %252 = vmatprep.subr.mxu0 0.0
      %253 = vmatpush1.msra.mxu0 0.0
      %254 = vmatprep.subr.mxu0 0.0
      %255 = vmatpush1.msra.mxu0 0.0
      %256 = vmatprep.subr.mxu0 0.0
      %257 = vmatpush1.msra.mxu0 0.0
      %258 = vmatprep.subr.mxu0 0.0
      %259 = vmatpush1.msra.mxu0 0.0
      %260 = vmatprep.subr.mxu0 0.0
      %261 = vmatpush1.msra.mxu0 0.0
      %262 = vmatprep.subr.mxu0 0.0
      %263 = vmatpush1.msra.mxu0 0.0
      %264 = vmatprep.subr.mxu0 0.0
      %265 = vmatpush1.msra.mxu0 0.0
      %266 = vmatprep.subr.mxu0 0.0
      %267 = vmatpush1.msra.mxu0 0.0
      %268 = vmatprep.subr.mxu0 0.0
      %269 = vmatpush1.msra.mxu0 0.0
      %270 = vmatprep.subr.mxu0 0.0
      %271 = vmatpush1.msra.mxu0 0.0
      %272 = vmatprep.subr.mxu0 0.0
      %273 = vmatpush1.msra.mxu0 0.0
      %274 = vmatprep.subr.mxu0 0.0
      %275 = vmatpush1.msra.mxu0 0.0
      %276 = vmatprep.subr.mxu0 0.0
      %277 = vmatpush1.msra.mxu0 0.0
      %278 = vmatprep.subr.mxu0 0.0
      %279 = vmatpush1.msra.mxu0 0.0
      %280 = vmatprep.subr.mxu0 0.0
      %281 = vmatpush1.msra.mxu0 0.0
      %282 = vmatprep.subr.mxu0 0.0
      %283 = vmatpush1.msra.mxu0 0.0
      %284 = vmatprep.subr.mxu0 0.0
      %285 = vmatpush1.msra.mxu0 0.0
      %286 = vmatprep.subr.mxu0 0.0
      %287 = vmatpush1.msra.mxu0 0.0
      %288 = vmatprep.subr.mxu0 0.0
      %289 = vmatpush1.msra.mxu0 0.0
      %290 = vmatprep.subr.mxu0 0.0
      %291 = vmatpush1.msra.mxu0 0.0
      %292 = vmatprep.mubr.f32.mxu0 0.0
      %293 = vmatmul.mubr.f32.gmra.mrb[0].mxu0 %v226
      %v294 = vpop.f32.mrb[0].mxu0
      %v295 = vadd.f32 %v206, %v294
      %v296 = vpop.f32.mrb[0].mxu0
      %297 = vdwg.mxu0
      %v298 = vmax.f32 %v295, 0.0
      %v299 = vld [vmem:[%s3] sm:$0xff]
      %v300 = vld [vmem:[%s3 + $0x8] sm:$0xff]
      %v301 = vld [vmem:[%s4] sm:$0x1]
      %v303 = vlaneseq
      %v304 = vshrl.u32 %v303, 7
      %v305 = vsub.s32 0, %v304
      %v306 = vrot.slane %v301, %v305
      %vm308 = vcmask 130048
      %v310 = vsel %vm308, %v298, 0
      %312 = vmatprep.subr.mxu0 0.0
      %313 = vmatpush1.msra.mxu0 %v299
      %314 = vmatprep.subr.mxu0 0.0
      %315 = vmatpush1.msra.mxu0 %v300
      %316 = vmatprep.subr.mxu0 0.0
      %317 = vmatpush1.msra.mxu0 0.0
      %318 = vmatprep.subr.mxu0 0.0
      %319 = vmatpush1.msra.mxu0 0.0
      %320 = vmatprep.subr.mxu0 0.0
      %321 = vmatpush1.msra.mxu0 0.0
      %322 = vmatprep.subr.mxu0 0.0
      %323 = vmatpush1.msra.mxu0 0.0
      %324 = vmatprep.subr.mxu0 0.0
      %325 = vmatpush1.msra.mxu0 0.0
      %326 = vmatprep.subr.mxu0 0.0
      %327 = vmatpush1.msra.mxu0 0.0
      %328 = vmatprep.subr.mxu0 0.0
      %329 = vmatpush1.msra.mxu0 0.0
      %330 = vmatprep.subr.mxu0 0.0
      %331 = vmatpush1.msra.mxu0 0.0
      %332 = vmatprep.subr.mxu0 0.0
      %333 = vmatpush1.msra.mxu0 0.0
      %334 = vmatprep.subr.mxu0 0.0
      %335 = vmatpush1.msra.mxu0 0.0
      %336 = vmatprep.subr.mxu0 0.0
      %337 = vmatpush1.msra.mxu0 0.0
      %338 = vmatprep.subr.mxu0 0.0
      %339 = vmatpush1.msra.mxu0 0.0
      %340 = vmatprep.subr.mxu0 0.0
      %341 = vmatpush1.msra.mxu0 0.0
      %342 = vmatprep.subr.mxu0 0.0
      %343 = vmatpush1.msra.mxu0 0.0
      %344 = vmatprep.subr.mxu0 0.0
      %345 = vmatpush1.msra.mxu0 0.0
      %346 = vmatprep.subr.mxu0 0.0
      %347 = vmatpush1.msra.mxu0 0.0
      %348 = vmatprep.subr.mxu0 0.0
      %349 = vmatpush1.msra.mxu0 0.0
      %350 = vmatprep.subr.mxu0 0.0
      %351 = vmatpush1.msra.mxu0 0.0
      %352 = vmatprep.subr.mxu0 0.0
      %353 = vmatpush1.msra.mxu0 0.0
      %354 = vmatprep.subr.mxu0 0.0
      %355 = vmatpush1.msra.mxu0 0.0
      %356 = vmatprep.subr.mxu0 0.0
      %357 = vmatpush1.msra.mxu0 0.0
      %358 = vmatprep.subr.mxu0 0.0
      %359 = vmatpush1.msra.mxu0 0.0
      %360 = vmatprep.subr.mxu0 0.0
      %361 = vmatpush1.msra.mxu0 0.0
      %362 = vmatprep.subr.mxu0 0.0
      %363 = vmatpush1.msra.mxu0 0.0
      %364 = vmatprep.subr.mxu0 0.0
      %365 = vmatpush1.msra.mxu0 0.0
      %366 = vmatprep.subr.mxu0 0.0
      %367 = vmatpush1.msra.mxu0 0.0
      %368 = vmatprep.subr.mxu0 0.0
      %369 = vmatpush1.msra.mxu0 0.0
      %370 = vmatprep.subr.mxu0 0.0
      %371 = vmatpush1.msra.mxu0 0.0
      %372 = vmatprep.subr.mxu0 0.0
      %373 = vmatpush1.msra.mxu0 0.0
      %374 = vmatprep.subr.mxu0 0.0
      %375 = vmatpush1.msra.mxu0 0.0
      %376 = vmatprep.mubr.f32.mxu0 0.0
      %377 = vmatmul.mubr.f32.gmra.mrb[0].mxu0 %v310
      %v378 = vpop.f32.mrb[0].mxu0
      %v379 = vadd.f32 %v306, %v378
      %v380 = vpop.f32.mrb[0].mxu0
      %381 = vdwg.mxu0
      %v382 = vmax.f32 %v379, 0.0
      %v383 = vld [vmem:[%s5] sm:$0xff]
      %v384 = vld [vmem:[%s6] sm:$0xff]
      %385 = vrot.lane.b32.xlu0 %v298, 112
      %v386 = vpop.permute.xlu0 %385
      %v387 = vsel %vm41, %v386, 0
      %389 = vmatprep.subr.mxu0 0.0
      %390 = vmatpush1.msra.mxu0 %v384
      %391 = vmatprep.subr.mxu0 0.0
      %392 = vmatpush1.msra.mxu0 0.0
      %393 = vmatprep.subr.mxu0 0.0
      %394 = vmatpush1.msra.mxu0 0.0
      %395 = vmatprep.subr.mxu0 0.0
      %396 = vmatpush1.msra.mxu0 0.0
      %397 = vmatprep.subr.mxu0 0.0
      %398 = vmatpush1.msra.mxu0 0.0
      %399 = vmatprep.subr.mxu0 0.0
      %400 = vmatpush1.msra.mxu0 0.0
      %401 = vmatprep.subr.mxu0 0.0
      %402 = vmatpush1.msra.mxu0 0.0
      %403 = vmatprep.subr.mxu0 0.0
      %404 = vmatpush1.msra.mxu0 0.0
      %405 = vmatprep.subr.mxu0 0.0
      %406 = vmatpush1.msra.mxu0 0.0
      %407 = vmatprep.subr.mxu0 0.0
      %408 = vmatpush1.msra.mxu0 0.0
      %409 = vmatprep.subr.mxu0 0.0
      %410 = vmatpush1.msra.mxu0 0.0
      %411 = vmatprep.subr.mxu0 0.0
      %412 = vmatpush1.msra.mxu0 0.0
      %413 = vmatprep.subr.mxu0 0.0
      %414 = vmatpush1.msra.mxu0 0.0
      %415 = vmatprep.subr.mxu0 0.0
      %416 = vmatpush1.msra.mxu0 0.0
      %417 = vmatprep.subr.mxu0 0.0
      %418 = vmatpush1.msra.mxu0 0.0
      %419 = vmatprep.subr.mxu0 0.0
      %420 = vmatpush1.msra.mxu0 0.0
      %421 = vmatprep.subr.mxu0 0.0
      %422 = vmatpush1.msra.mxu0 0.0
      %423 = vmatprep.subr.mxu0 0.0
      %424 = vmatpush1.msra.mxu0 0.0
      %425 = vmatprep.subr.mxu0 0.0
      %426 = vmatpush1.msra.mxu0 0.0
      %427 = vmatprep.subr.mxu0 0.0
      %428 = vmatpush1.msra.mxu0 0.0
      %429 = vmatprep.subr.mxu0 0.0
      %430 = vmatpush1.msra.mxu0 0.0
      %431 = vmatprep.subr.mxu0 0.0
      %432 = vmatpush1.msra.mxu0 0.0
      %433 = vmatprep.subr.mxu0 0.0
      %434 = vmatpush1.msra.mxu0 0.0
      %435 = vmatprep.subr.mxu0 0.0
      %436 = vmatpush1.msra.mxu0 0.0
      %437 = vmatprep.subr.mxu0 0.0
      %438 = vmatpush1.msra.mxu0 0.0
      %439 = vmatprep.subr.mxu0 0.0
      %440 = vmatpush1.msra.mxu0 0.0
      %441 = vmatprep.subr.mxu0 0.0
      %442 = vmatpush1.msra.mxu0 0.0
      %443 = vmatprep.subr.mxu0 0.0
      %444 = vmatpush1.msra.mxu0 0.0
      %445 = vmatprep.subr.mxu0 0.0
      %446 = vmatpush1.msra.mxu0 0.0
      %447 = vmatprep.subr.mxu0 0.0
      %448 = vmatpush1.msra.mxu0 0.0
      %449 = vmatprep.subr.mxu0 0.0
      %450 = vmatpush1.msra.mxu0 0.0
      %451 = vmatprep.subr.mxu0 0.0
      %452 = vmatpush1.msra.mxu0 0.0
      %453 = vmatprep.mubr.f32.mxu0 0.0
      %454 = vmatmul.mubr.f32.gmra.mrb[0].mxu0 %v387
      %v455 = vpop.f32.mrb[0].mxu0
      %v456 = vadd.f32 0.0, %v455
      %v457 = vpop.f32.mrb[0].mxu0
      %458 = vdwg.mxu0
      %v460 = vsel %vm41, %v382, 0
      %462 = vmatprep.subr.mxu0 0.0
      %463 = vmatpush1.msra.mxu0 %v383
      %464 = vmatprep.subr.mxu0 0.0
      %465 = vmatpush1.msra.mxu0 0.0
      %466 = vmatprep.subr.mxu0 0.0
      %467 = vmatpush1.msra.mxu0 0.0
      %468 = vmatprep.subr.mxu0 0.0
      %469 = vmatpush1.msra.mxu0 0.0
      %470 = vmatprep.subr.mxu0 0.0
      %471 = vmatpush1.msra.mxu0 0.0
      %472 = vmatprep.subr.mxu0 0.0
      %473 = vmatpush1.msra.mxu0 0.0
      %474 = vmatprep.subr.mxu0 0.0
      %475 = vmatpush1.msra.mxu0 0.0
      %476 = vmatprep.subr.mxu0 0.0
      %477 = vmatpush1.msra.mxu0 0.0
      %478 = vmatprep.subr.mxu0 0.0
      %479 = vmatpush1.msra.mxu0 0.0
      %480 = vmatprep.subr.mxu0 0.0
      %481 = vmatpush1.msra.mxu0 0.0
      %482 = vmatprep.subr.mxu0 0.0
      %483 = vmatpush1.msra.mxu0 0.0
      %484 = vmatprep.subr.mxu0 0.0
      %485 = vmatpush1.msra.mxu0 0.0
      %486 = vmatprep.subr.mxu0 0.0
      %487 = vmatpush1.msra.mxu0 0.0
      %488 = vmatprep.subr.mxu0 0.0
      %489 = vmatpush1.msra.mxu0 0.0
      %490 = vmatprep.subr.mxu0 0.0
      %491 = vmatpush1.msra.mxu0 0.0
      %492 = vmatprep.subr.mxu0 0.0
      %493 = vmatpush1.msra.mxu0 0.0
      %494 = vmatprep.subr.mxu0 0.0
      %495 = vmatpush1.msra.mxu0 0.0
      %496 = vmatprep.subr.mxu0 0.0
      %497 = vmatpush1.msra.mxu0 0.0
      %498 = vmatprep.subr.mxu0 0.0
      %499 = vmatpush1.msra.mxu0 0.0
      %500 = vmatprep.subr.mxu0 0.0
      %501 = vmatpush1.msra.mxu0 0.0
      %502 = vmatprep.subr.mxu0 0.0
      %503 = vmatpush1.msra.mxu0 0.0
      %504 = vmatprep.subr.mxu0 0.0
      %505 = vmatpush1.msra.mxu0 0.0
      %506 = vmatprep.subr.mxu0 0.0
      %507 = vmatpush1.msra.mxu0 0.0
      %508 = vmatprep.subr.mxu0 0.0
      %509 = vmatpush1.msra.mxu0 0.0
      %510 = vmatprep.subr.mxu0 0.0
      %511 = vmatpush1.msra.mxu0 0.0
      %512 = vmatprep.subr.mxu0 0.0
      %513 = vmatpush1.msra.mxu0 0.0
      %514 = vmatprep.subr.mxu0 0.0
      %515 = vmatpush1.msra.mxu0 0.0
      %516 = vmatprep.subr.mxu0 0.0
      %517 = vmatpush1.msra.mxu0 0.0
      %518 = vmatprep.subr.mxu0 0.0
      %519 = vmatpush1.msra.mxu0 0.0
      %520 = vmatprep.subr.mxu0 0.0
      %521 = vmatpush1.msra.mxu0 0.0
      %522 = vmatprep.subr.mxu0 0.0
      %523 = vmatpush1.msra.mxu0 0.0
      %524 = vmatprep.subr.mxu0 0.0
      %525 = vmatpush1.msra.mxu0 0.0
      %526 = vmatprep.mubr.f32.mxu0 0.0
      %527 = vmatmul.mubr.f32.gmra.mrb[0].mxu0 %v460
      %v528 = vpop.f32.mrb[0].mxu0
      %v529 = vadd.f32 %v456, %v528
      %v530 = vpop.f32.mrb[0].mxu0
      %531 = vdwg.mxu0
      %v532 = vld [vmem:[%s7] sm:$0x1]
      %v534 = vlaneseq
      %v535 = vshrl.u32 %v534, 7
      %v536 = vsub.s32 0, %v535
      %v537 = vrot.slane %v532, %v536
      %v539 = vadd.f32 %v529, %v537
      %v540 = vlaneseq
      %v541 = vand.u32 %v540, 127
      %vm542 = vcmp.eq.s32.totalorder %v541, 3
      %v543 = vxor.u32 %v539, 2147483648
      %v544 = vmul.f32 %v543, 1.442695
      %v545 = vpow.pop %v544
      %v546 = vadd.f32 %v545, 1.0
      %v547 = vrcp.pop %v546
      %v548 = vmul.f32 1.0, %v547
      %v549 = vsel %vm542, %v548, %v539
      %550 = vst [vmem:[#allocation3] sm:$0x3] %v549
    $region41: #{tpu_custom_call.1} parent=1 // pred_fallthru
      _
    // Predicated region
    $region42: #{tpu_custom_call.1} parent=1 // pred_check
      _
    $region43: #{tpu_custom_call.1} parent=1 // pred_check_branch
      %552 = sbr.rel (0) target = $region45
    $region44: #{tpu_custom_call.1} parent=1 // pred_region
      %s554 = ssub.s32 32, 32
      %555 = vsyncadd [#allocation4], %s554
      %s557 = sshll.u32 [#allocation3], 4
      %s558 = int_to_ptr.vmem [resolvable:$true] %s557
      %560 = dma.vmem_to_hbm [thread:$0]  %s558, 32, %s8, [#allocation4]
    $region45: #{tpu_custom_call.1} parent=1 // pred_fallthru
      _
    // Predicated region
    $region46: #{tpu_custom_call.1} parent=1 // pred_check
      _
    $region47: #{tpu_custom_call.1} parent=1 // pred_check_branch
      %562 = sbr.rel (0) target = $region49
    $region48: #{tpu_custom_call.1} parent=1 // pred_region
      %563 = dma.done [#allocation4], 32
    $region49: #{tpu_custom_call.1} parent=1 // pred_fallthru
      _
    %564 = vsyncpa [#allocation4], 1

// kernel: tpu_custom_call.1
$region0: #{tpu_custom_call.1}
  #allocation0 [shape = 'u32[]', space=smem, size = 0x4, offset = 0x4, fixed_abs, tag = 'smem constant byte address 0x4 - core index']
  #allocation1 [shape = 'u32[144,128]{1,0:T(1,128)}', space=vmem, size = 0x12000, scoped, tag = 'internal scratch']
  #allocation2 [shape = 'f32[2,1,32]{2,1,0:T(1,128)}', space=vmem, size = 0x400, scoped, tag = 'scratch operand']
  %s0 = inlined_call_operand.vmem [shape: f32[2,8,32], index: 0, kind: input, shape index: {}]
  %s1 = inlined_call_operand.vmem [shape: f32[32,24], index: 1, kind: input, shape index: {}]
  %s2 = inlined_call_operand.vmem [shape: f32[1,24], index: 2, kind: input, shape index: {}]
  %s3 = inlined_call_operand.vmem [shape: f32[16,8], index: 3, kind: input, shape index: {}]
  %s4 = inlined_call_operand.vmem [shape: f32[1,8], index: 4, kind: input, shape index: {}]
  %s5 = inlined_call_operand.vmem [shape: f32[8,128], index: 5, kind: input, shape index: {}]
  %s6 = inlined_call_operand.vmem [shape: f32[8,128], index: 6, kind: input, shape index: {}]
  %s7 = inlined_call_operand.vmem [shape: f32[1,128], index: 7, kind: input, shape index: {}]
  %s8 = inlined_call_operand.hbm [shape: f32[2,128], index: 8, kind: output, shape index: {}]
  %s9 = sld [smem:[#allocation0]]
  $region50: #{tpu_custom_call.1} parent=0
    _
  %s11 = ssub.s32 1, %s9
  %s12 = scalar_select 0, %s11, %s9
  $region1: #{tpu_custom_call.1} parent=0
    #allocation3 [shape = 'u8[1024]{0}', space=vmem, size = 0x400, scoped, tag = 'output window, operand 0, single buffered']
    #allocation4 [shape = 's32[1]{0}', space=sflag, size = 0x4, scoped, tag = 'scoped memory for tpu_custom_call.1']
    %13 = vsyncpa [#allocation4], 0
    // Predicated region
    $region2: #{tpu_custom_call.1} parent=1 // pred_check
      _
    $region3: #{tpu_custom_call.1} parent=1 // pred_check_branch
      %15 = sbr.rel (0) target = $region5
    $region4: #{tpu_custom_call.1} parent=1 // pred_region
      _
    $region5: #{tpu_custom_call.1} parent=1 // pred_fallthru
      _
    // Predicated region
    $region6: #{tpu_custom_call.1} parent=1 // pred_check
      _
    $region7: #{tpu_custom_call.1} parent=1 // pred_check_branch
      %17 = sbr.rel (0) target = $region9
    $region8: #{tpu_custom_call.1} parent=1 // pred_region
      _
    $region9: #{tpu_custom_call.1} parent=1 // pred_fallthru
      _
    // Predicated region
    $region10: #{tpu_custom_call.1} parent=1 // pred_check
      _
    $region11: #{tpu_custom_call.1} parent=1 // pred_check_branch
      %19 = sbr.rel (0) target = $region13
    $region12: #{tpu_custom_call.1} parent=1 // pred_region
      _
    $region13: #{tpu_custom_call.1} parent=1 // pred_fallthru
      _
    // Predicated region
    $region14: #{tpu_custom_call.1} parent=1 // pred_check
      _
    $region15: #{tpu_custom_call.1} parent=1 // pred_check_branch
      %21 = sbr.rel (0) target = $region17
    $region16: #{tpu_custom_call.1} parent=1 // pred_region
      _
    $region17: #{tpu_custom_call.1} parent=1 // pred_fallthru
      _
    // Predicated region
    $region18: #{tpu_custom_call.1} parent=1 // pred_check
      _
    $region19: #{tpu_custom_call.1} parent=1 // pred_check_branch
      %23 = sbr.rel (0) target = $region21
    $region20: #{tpu_custom_call.1} parent=1 // pred_region
      _
    $region21: #{tpu_custom_call.1} parent=1 // pred_fallthru
      _
    // Predicated region
    $region22: #{tpu_custom_call.1} parent=1 // pred_check
      _
    $region23: #{tpu_custom_call.1} parent=1 // pred_check_branch
      %25 = sbr.rel (0) target = $region25
    $region24: #{tpu_custom_call.1} parent=1 // pred_region
      _
    $region25: #{tpu_custom_call.1} parent=1 // pred_fallthru
      _
    // Predicated region
    $region26: #{tpu_custom_call.1} parent=1 // pred_check
      _
    $region27: #{tpu_custom_call.1} parent=1 // pred_check_branch
      %27 = sbr.rel (0) target = $region29
    $region28: #{tpu_custom_call.1} parent=1 // pred_region
      _
    $region29: #{tpu_custom_call.1} parent=1 // pred_fallthru
      _
    // Predicated region
    $region30: #{tpu_custom_call.1} parent=1 // pred_check
      _
    $region31: #{tpu_custom_call.1} parent=1 // pred_check_branch
      %29 = sbr.rel (0) target = $region33
    $region32: #{tpu_custom_call.1} parent=1 // pred_region
      _
    $region33: #{tpu_custom_call.1} parent=1 // pred_fallthru
      _
    %p30 = scmp.eq.s32.totalorder 0, 0
    // Predicated region
    $region34: #{tpu_custom_call.1} parent=1 // pred_check
      %p31 = pneg %p30
    $region35: #{tpu_custom_call.1} parent=1 // pred_check_branch
      %33 = sbr.rel (%p31) target = $region37
    $region36: #{tpu_custom_call.1} parent=1 // pred_region
      %vm34 = vcmask 253952
      %35 = vst.msk [vmem:[#allocation2] sm:$0x1] %vm34, 0.0
      %36 = vst.msk [vmem:[#allocation2 + $0x1] sm:$0x1] %vm34, 0.0
    $region37: #{tpu_custom_call.1} parent=1 // pred_fallthru
      _
    %v37 = vld [vmem:[%s0] sm:$0xff]
    %v38 = vld [vmem:[%s0 + $0x8] sm:$0xff]
    %v39 = vld [vmem:[#allocation2] sm:$0x1]
    %v40 = vld [vmem:[#allocation2 + $0x1] sm:$0x1]
    %vm41 = vcmask 64512
    %v43 = vsel %vm41, 1.0, 0
    %45 = vmatprep.subr.mxu0 0.0
    %46 = vmatpush1.msra.mxu0 %v37
    %47 = vmatprep.subr.mxu0 0.0
    %48 = vmatpush1.msra.mxu0 0.0
    %49 = vmatprep.subr.mxu0 0.0
    %50 = vmatpush1.msra.mxu0 0.0
    %51 = vmatprep.subr.mxu0 0.0
    %52 = vmatpush1.msra.mxu0 0.0
    %53 = vmatprep.subr.mxu0 0.0
    %54 = vmatpush1.msra.mxu0 0.0
    %55 = vmatprep.subr.mxu0 0.0
    %56 = vmatpush1.msra.mxu0 0.0
    %57 = vmatprep.subr.mxu0 0.0
    %58 = vmatpush1.msra.mxu0 0.0
    %59 = vmatprep.subr.mxu0 0.0
    %60 = vmatpush1.msra.mxu0 0.0
    %61 = vmatprep.subr.mxu0 0.0
    %62 = vmatpush1.msra.mxu0 0.0
    %63 = vmatprep.subr.mxu0 0.0
    %64 = vmatpush1.msra.mxu0 0.0
    %65 = vmatprep.subr.mxu0 0.0
    %66 = vmatpush1.msra.mxu0 0.0
    %67 = vmatprep.subr.mxu0 0.0
    %68 = vmatpush1.msra.mxu0 0.0
    %69 = vmatprep.subr.mxu0 0.0
    %70 = vmatpush1.msra.mxu0 0.0
    %71 = vmatprep.subr.mxu0 0.0
    %72 = vmatpush1.msra.mxu0 0.0
    %73 = vmatprep.subr.mxu0 0.0
    %74 = vmatpush1.msra.mxu0 0.0
    %75 = vmatprep.subr.mxu0 0.0
    %76 = vmatpush1.msra.mxu0 0.0
    %77 = vmatprep.subr.mxu0 0.0
    %78 = vmatpush1.msra.mxu0 0.0
    %79 = vmatprep.subr.mxu0 0.0
    %80 = vmatpush1.msra.mxu0 0.0
    %81 = vmatprep.subr.mxu0 0.0
    %82 = vmatpush1.msra.mxu0 0.0
    %83 = vmatprep.subr.mxu0 0.0
    %84 = vmatpush1.msra.mxu0 0.0
    %85 = vmatprep.subr.mxu0 0.0
    %86 = vmatpush1.msra.mxu0 0.0
    %87 = vmatprep.subr.mxu0 0.0
    %88 = vmatpush1.msra.mxu0 0.0
    %89 = vmatprep.subr.mxu0 0.0
    %90 = vmatpush1.msra.mxu0 0.0
    %91 = vmatprep.subr.mxu0 0.0
    %92 = vmatpush1.msra.mxu0 0.0
    %93 = vmatprep.subr.mxu0 0.0
    %94 = vmatpush1.msra.mxu0 0.0
    %95 = vmatprep.subr.mxu0 0.0
    %96 = vmatpush1.msra.mxu0 0.0
    %97 = vmatprep.subr.mxu0 0.0
    %98 = vmatpush1.msra.mxu0 0.0
    %99 = vmatprep.subr.mxu0 0.0
    %100 = vmatpush1.msra.mxu0 0.0
    %101 = vmatprep.subr.mxu0 0.0
    %102 = vmatpush1.msra.mxu0 0.0
    %103 = vmatprep.subr.mxu0 0.0
    %104 = vmatpush1.msra.mxu0 0.0
    %105 = vmatprep.subr.mxu0 0.0
    %106 = vmatpush1.msra.mxu0 0.0
    %107 = vmatprep.subr.mxu0 0.0
    %108 = vmatpush1.msra.mxu0 0.0
    %109 = vmatprep.mubr.f32.mxu0 0.0
    %110 = vmatmul.mubr.f32.gmra.mrb[0].mxu0 %v43
    %v111 = vpop.f32.mrb[0].mxu0
    %v112 = vadd.f32 0.0, %v111
    %v113 = vpop.f32.mrb[0].mxu0
    %114 = vdwg.mxu0
    %115 = vmatprep.subr.mxu0 0.0
    %116 = vmatpush1.msra.mxu0 %v38
    %117 = vmatprep.subr.mxu0 0.0
    %118 = vmatpush1.msra.mxu0 0.0
    %119 = vmatprep.subr.mxu0 0.0
    %120 = vmatpush1.msra.mxu0 0.0
    %121 = vmatprep.subr.mxu0 0.0
    %122 = vmatpush1.msra.mxu0 0.0
    %123 = vmatprep.subr.mxu0 0.0
    %124 = vmatpush1.msra.mxu0 0.0
    %125 = vmatprep.subr.mxu0 0.0
    %126 = vmatpush1.msra.mxu0 0.0
    %127 = vmatprep.subr.mxu0 0.0
    %128 = vmatpush1.msra.mxu0 0.0
    %129 = vmatprep.subr.mxu0 0.0
    %130 = vmatpush1.msra.mxu0 0.0
    %131 = vmatprep.subr.mxu0 0.0
    %132 = vmatpush1.msra.mxu0 0.0
    %133 = vmatprep.subr.mxu0 0.0
    %134 = vmatpush1.msra.mxu0 0.0
    %135 = vmatprep.subr.mxu0 0.0
    %136 = vmatpush1.msra.mxu0 0.0
    %137 = vmatprep.subr.mxu0 0.0
    %138 = vmatpush1.msra.mxu0 0.0
    %139 = vmatprep.subr.mxu0 0.0
    %140 = vmatpush1.msra.mxu0 0.0
    %141 = vmatprep.subr.mxu0 0.0
    %142 = vmatpush1.msra.mxu0 0.0
    %143 = vmatprep.subr.mxu0 0.0
    %144 = vmatpush1.msra.mxu0 0.0
    %145 = vmatprep.subr.mxu0 0.0
    %146 = vmatpush1.msra.mxu0 0.0
    %147 = vmatprep.subr.mxu0 0.0
    %148 = vmatpush1.msra.mxu0 0.0
    %149 = vmatprep.subr.mxu0 0.0
    %150 = vmatpush1.msra.mxu0 0.0
    %151 = vmatprep.subr.mxu0 0.0
    %152 = vmatpush1.msra.mxu0 0.0
    %153 = vmatprep.subr.mxu0 0.0
    %154 = vmatpush1.msra.mxu0 0.0
    %155 = vmatprep.subr.mxu0 0.0
    %156 = vmatpush1.msra.mxu0 0.0
    %157 = vmatprep.subr.mxu0 0.0
    %158 = vmatpush1.msra.mxu0 0.0
    %159 = vmatprep.subr.mxu0 0.0
    %160 = vmatpush1.msra.mxu0 0.0
    %161 = vmatprep.subr.mxu0 0.0
    %162 = vmatpush1.msra.mxu0 0.0
    %163 = vmatprep.subr.mxu0 0.0
    %164 = vmatpush1.msra.mxu0 0.0
    %165 = vmatprep.subr.mxu0 0.0
    %166 = vmatpush1.msra.mxu0 0.0
    %167 = vmatprep.subr.mxu0 0.0
    %168 = vmatpush1.msra.mxu0 0.0
    %169 = vmatprep.subr.mxu0 0.0
    %170 = vmatpush1.msra.mxu0 0.0
    %171 = vmatprep.subr.mxu0 0.0
    %172 = vmatpush1.msra.mxu0 0.0
    %173 = vmatprep.subr.mxu0 0.0
    %174 = vmatpush1.msra.mxu0 0.0
    %175 = vmatprep.subr.mxu0 0.0
    %176 = vmatpush1.msra.mxu0 0.0
    %177 = vmatprep.subr.mxu0 0.0
    %178 = vmatpush1.msra.mxu0 0.0
    %179 = vmatprep.mubr.f32.mxu0 0.0
    %180 = vmatmul.mubr.f32.gmra.mrb[0].mxu0 %v43
    %v181 = vpop.f32.mrb[0].mxu0
    %v182 = vadd.f32 0.0, %v181
    %v183 = vpop.f32.mrb[0].mxu0
    %184 = vdwg.mxu0
    %v185 = vadd.f32 %v39, %v112
    %v186 = vadd.f32 %v40, %v182
    %vm187 = vcmask 253952
    %188 = vst.msk [vmem:[#allocation2] sm:$0x1] %vm187, %v185
    %189 = vst.msk [vmem:[#allocation2 + $0x1] sm:$0x1] %vm187, %v186
    // Predicated region
    $region38: #{tpu_custom_call.1} parent=1 // pred_check
      %p190 = pneg %p30
    $region39: #{tpu_custom_call.1} parent=1 // pred_check_branch
      %192 = sbr.rel (%p190) target = $region41
    $region40: #{tpu_custom_call.1} parent=1 // pred_region
      %v193 = vld [vmem:[#allocation2] sm:$0x1]
      %v194 = vld [vmem:[#allocation2 + $0x1] sm:$0x1]
      %v195 = vmul.f32 %v193, 0.125
      %v196 = vmul.f32 %v194, 0.125
      %v197 = vld [vmem:[%s1] sm:$0xff]
      %v198 = vld [vmem:[%s1 + $0x8] sm:$0xff]
      %v199 = vld [vmem:[%s1 + $0x10] sm:$0xff]
      %v200 = vld [vmem:[%s1 + $0x18] sm:$0xff]
      %v201 = vld [vmem:[%s2] sm:$0x1]
      %v203 = vlaneseq
      %v204 = vshrl.u32 %v203, 7
      %v205 = vsub.s32 0, %v204
      %v206 = vrot.slane %v201, %v205
      %v210 = vcombine.low %v195, %v196
      %v212 = vunpack.c.l.s4 1966171168
      %v213 = vunpack.c.0.s8 %v212
      %v214 = vlaneseq
      %v215 = vshrl.u32 %v214, 7
      %v216 = vsub.s32 %v213, %v215
      %v217 = vrot.slane %v210, %v216
      %v219 = vunpack.c.l.s4 1966171168
      %v220 = vunpack.c.0.s8 %v219
      %v221 = vlaneseq
      %v222 = vshrl.u32 %v221, 7
      %v223 = vsub.s32 %v220, %v222
      %v224 = vrot.slane %v217, %v223
      %vm225 = vcmask 261120
      %v226 = vsel %vm225, %v224, 0
      %228 = vmatprep.subr.mxu0 0.0
      %229 = vmatpush1.msra.mxu0 %v197
      %230 = vmatprep.subr.mxu0 0.0
      %231 = vmatpush1.msra.mxu0 %v198
      %232 = vmatprep.subr.mxu0 0.0
      %233 = vmatpush1.msra.mxu0 %v199
      %234 = vmatprep.subr.mxu0 0.0
      %235 = vmatpush1.msra.mxu0 %v200
      %236 = vmatprep.subr.mxu0 0.0
      %237 = vmatpush1.msra.mxu0 0.0
      %238 = vmatprep.subr.mxu0 0.0
      %239 = vmatpush1.msra.mxu0 0.0
      %240 = vmatprep.subr.mxu0 0.0
      %241 = vmatpush1.msra.mxu0 0.0
      %242 = vmatprep.subr.mxu0 0.0
      %243 = vmatpush1.msra.mxu0 0.0
      %244 = vmatprep.subr.mxu0 0.0
      %245 = vmatpush1.msra.mxu0 0.0
      %246 = vmatprep.subr.mxu0 0.0
      %247 = vmatpush1.msra.mxu0 0.0
      %248 = vmatprep.subr.mxu0 0.0
      %249 = vmatpush1.msra.mxu0 0.0
      %250 = vmatprep.subr.mxu0 0.0
      %251 = vmatpush1.msra.mxu0 0.0
      %252 = vmatprep.subr.mxu0 0.0
      %253 = vmatpush1.msra.mxu0 0.0
      %254 = vmatprep.subr.mxu0 0.0
      %255 = vmatpush1.msra.mxu0 0.0
      %256 = vmatprep.subr.mxu0 0.0
      %257 = vmatpush1.msra.mxu0 0.0
      %258 = vmatprep.subr.mxu0 0.0
      %259 = vmatpush1.msra.mxu0 0.0
      %260 = vmatprep.subr.mxu0 0.0
      %261 = vmatpush1.msra.mxu0 0.0
      %262 = vmatprep.subr.mxu0 0.0
      %263 = vmatpush1.msra.mxu0 0.0
      %264 = vmatprep.subr.mxu0 0.0
      %265 = vmatpush1.msra.mxu0 0.0
      %266 = vmatprep.subr.mxu0 0.0
      %267 = vmatpush1.msra.mxu0 0.0
      %268 = vmatprep.subr.mxu0 0.0
      %269 = vmatpush1.msra.mxu0 0.0
      %270 = vmatprep.subr.mxu0 0.0
      %271 = vmatpush1.msra.mxu0 0.0
      %272 = vmatprep.subr.mxu0 0.0
      %273 = vmatpush1.msra.mxu0 0.0
      %274 = vmatprep.subr.mxu0 0.0
      %275 = vmatpush1.msra.mxu0 0.0
      %276 = vmatprep.subr.mxu0 0.0
      %277 = vmatpush1.msra.mxu0 0.0
      %278 = vmatprep.subr.mxu0 0.0
      %279 = vmatpush1.msra.mxu0 0.0
      %280 = vmatprep.subr.mxu0 0.0
      %281 = vmatpush1.msra.mxu0 0.0
      %282 = vmatprep.subr.mxu0 0.0
      %283 = vmatpush1.msra.mxu0 0.0
      %284 = vmatprep.subr.mxu0 0.0
      %285 = vmatpush1.msra.mxu0 0.0
      %286 = vmatprep.subr.mxu0 0.0
      %287 = vmatpush1.msra.mxu0 0.0
      %288 = vmatprep.subr.mxu0 0.0
      %289 = vmatpush1.msra.mxu0 0.0
      %290 = vmatprep.subr.mxu0 0.0
      %291 = vmatpush1.msra.mxu0 0.0
      %292 = vmatprep.mubr.f32.mxu0 0.0
      %293 = vmatmul.mubr.f32.gmra.mrb[0].mxu0 %v226
      %v294 = vpop.f32.mrb[0].mxu0
      %v295 = vadd.f32 %v206, %v294
      %v296 = vpop.f32.mrb[0].mxu0
      %297 = vdwg.mxu0
      %v298 = vmax.f32 %v295, 0.0
      %v299 = vld [vmem:[%s3] sm:$0xff]
      %v300 = vld [vmem:[%s3 + $0x8] sm:$0xff]
      %v301 = vld [vmem:[%s4] sm:$0x1]
      %v303 = vlaneseq
      %v304 = vshrl.u32 %v303, 7
      %v305 = vsub.s32 0, %v304
      %v306 = vrot.slane %v301, %v305
      %vm308 = vcmask 130048
      %v310 = vsel %vm308, %v298, 0
      %312 = vmatprep.subr.mxu0 0.0
      %313 = vmatpush1.msra.mxu0 %v299
      %314 = vmatprep.subr.mxu0 0.0
      %315 = vmatpush1.msra.mxu0 %v300
      %316 = vmatprep.subr.mxu0 0.0
      %317 = vmatpush1.msra.mxu0 0.0
      %318 = vmatprep.subr.mxu0 0.0
      %319 = vmatpush1.msra.mxu0 0.0
      %320 = vmatprep.subr.mxu0 0.0
      %321 = vmatpush1.msra.mxu0 0.0
      %322 = vmatprep.subr.mxu0 0.0
      %323 = vmatpush1.msra.mxu0 0.0
      %324 = vmatprep.subr.mxu0 0.0
      %325 = vmatpush1.msra.mxu0 0.0
      %326 = vmatprep.subr.mxu0 0.0
      %327 = vmatpush1.msra.mxu0 0.0
      %328 = vmatprep.subr.mxu0 0.0
      %329 = vmatpush1.msra.mxu0 0.0
      %330 = vmatprep.subr.mxu0 0.0
      %331 = vmatpush1.msra.mxu0 0.0
      %332 = vmatprep.subr.mxu0 0.0
      %333 = vmatpush1.msra.mxu0 0.0
      %334 = vmatprep.subr.mxu0 0.0
      %335 = vmatpush1.msra.mxu0 0.0
      %336 = vmatprep.subr.mxu0 0.0
      %337 = vmatpush1.msra.mxu0 0.0
      %338 = vmatprep.subr.mxu0 0.0
      %339 = vmatpush1.msra.mxu0 0.0
      %340 = vmatprep.subr.mxu0 0.0
      %341 = vmatpush1.msra.mxu0 0.0
      %342 = vmatprep.subr.mxu0 0.0
      %343 = vmatpush1.msra.mxu0 0.0
      %344 = vmatprep.subr.mxu0 0.0
      %345 = vmatpush1.msra.mxu0 0.0
      %346 = vmatprep.subr.mxu0 0.0
      %347 = vmatpush1.msra.mxu0 0.0
      %348 = vmatprep.subr.mxu0 0.0
      %349 = vmatpush1.msra.mxu0 0.0
      %350 = vmatprep.subr.mxu0 0.0
      %351 = vmatpush1.msra.mxu0 0.0
      %352 = vmatprep.subr.mxu0 0.0
      %353 = vmatpush1.msra.mxu0 0.0
      %354 = vmatprep.subr.mxu0 0.0
      %355 = vmatpush1.msra.mxu0 0.0
      %356 = vmatprep.subr.mxu0 0.0
      %357 = vmatpush1.msra.mxu0 0.0
      %358 = vmatprep.subr.mxu0 0.0
      %359 = vmatpush1.msra.mxu0 0.0
      %360 = vmatprep.subr.mxu0 0.0
      %361 = vmatpush1.msra.mxu0 0.0
      %362 = vmatprep.subr.mxu0 0.0
      %363 = vmatpush1.msra.mxu0 0.0
      %364 = vmatprep.subr.mxu0 0.0
      %365 = vmatpush1.msra.mxu0 0.0
      %366 = vmatprep.subr.mxu0 0.0
      %367 = vmatpush1.msra.mxu0 0.0
      %368 = vmatprep.subr.mxu0 0.0
      %369 = vmatpush1.msra.mxu0 0.0
      %370 = vmatprep.subr.mxu0 0.0
      %371 = vmatpush1.msra.mxu0 0.0
      %372 = vmatprep.subr.mxu0 0.0
      %373 = vmatpush1.msra.mxu0 0.0
      %374 = vmatprep.subr.mxu0 0.0
      %375 = vmatpush1.msra.mxu0 0.0
      %376 = vmatprep.mubr.f32.mxu0 0.0
      %377 = vmatmul.mubr.f32.gmra.mrb[0].mxu0 %v310
      %v378 = vpop.f32.mrb[0].mxu0
      %v379 = vadd.f32 %v306, %v378
      %v380 = vpop.f32.mrb[0].mxu0
      %381 = vdwg.mxu0
      %v382 = vmax.f32 %v379, 0.0
      %v383 = vld [vmem:[%s5] sm:$0xff]
      %v384 = vld [vmem:[%s6] sm:$0xff]
      %385 = vrot.lane.b32.xlu0 %v298, 112
      %v386 = vpop.permute.xlu0 %385
      %v387 = vsel %vm41, %v386, 0
      %389 = vmatprep.subr.mxu0 0.0
      %390 = vmatpush1.msra.mxu0 %v384
      %391 = vmatprep.subr.mxu0 0.0
      %392 = vmatpush1.msra.mxu0 0.0
      %393 = vmatprep.subr.mxu0 0.0
      %394 = vmatpush1.msra.mxu0 0.0
      %395 = vmatprep.subr.mxu0 0.0
      %396 = vmatpush1.msra.mxu0 0.0
      %397 = vmatprep.subr.mxu0 0.0
      %398 = vmatpush1.msra.mxu0 0.0
      %399 = vmatprep.subr.mxu0 0.0
      %400 = vmatpush1.msra.mxu0 0.0
      %401 = vmatprep.subr.mxu0 0.0
      %402 = vmatpush1.msra.mxu0 0.0
      %403 = vmatprep.subr.mxu0 0.0
      %404 = vmatpush1.msra.mxu0 0.0
      %405 = vmatprep.subr.mxu0 0.0
      %406 = vmatpush1.msra.mxu0 0.0
      %407 = vmatprep.subr.mxu0 0.0
      %408 = vmatpush1.msra.mxu0 0.0
      %409 = vmatprep.subr.mxu0 0.0
      %410 = vmatpush1.msra.mxu0 0.0
      %411 = vmatprep.subr.mxu0 0.0
      %412 = vmatpush1.msra.mxu0 0.0
      %413 = vmatprep.subr.mxu0 0.0
      %414 = vmatpush1.msra.mxu0 0.0
      %415 = vmatprep.subr.mxu0 0.0
      %416 = vmatpush1.msra.mxu0 0.0
      %417 = vmatprep.subr.mxu0 0.0
      %418 = vmatpush1.msra.mxu0 0.0
      %419 = vmatprep.subr.mxu0 0.0
      %420 = vmatpush1.msra.mxu0 0.0
      %421 = vmatprep.subr.mxu0 0.0
      %422 = vmatpush1.msra.mxu0 0.0
      %423 = vmatprep.subr.mxu0 0.0
      %424 = vmatpush1.msra.mxu0 0.0
      %425 = vmatprep.subr.mxu0 0.0
      %426 = vmatpush1.msra.mxu0 0.0
      %427 = vmatprep.subr.mxu0 0.0
      %428 = vmatpush1.msra.mxu0 0.0
      %429 = vmatprep.subr.mxu0 0.0
      %430 = vmatpush1.msra.mxu0 0.0
      %431 = vmatprep.subr.mxu0 0.0
      %432 = vmatpush1.msra.mxu0 0.0
      %433 = vmatprep.subr.mxu0 0.0
      %434 = vmatpush1.msra.mxu0 0.0
      %435 = vmatprep.subr.mxu0 0.0
      %436 = vmatpush1.msra.mxu0 0.0
      %437 = vmatprep.subr.mxu0 0.0
      %438 = vmatpush1.msra.mxu0 0.0
      %439 = vmatprep.subr.mxu0 0.0
      %440 = vmatpush1.msra.mxu0 0.0
      %441 = vmatprep.subr.mxu0 0.0
      %442 = vmatpush1.msra.mxu0 0.0
      %443 = vmatprep.subr.mxu0 0.0
      %444 = vmatpush1.msra.mxu0 0.0
      %445 = vmatprep.subr.mxu0 0.0
      %446 = vmatpush1.msra.mxu0 0.0
      %447 = vmatprep.subr.mxu0 0.0
      %448 = vmatpush1.msra.mxu0 0.0
      %449 = vmatprep.subr.mxu0 0.0
      %450 = vmatpush1.msra.mxu0 0.0
      %451 = vmatprep.subr.mxu0 0.0
      %452 = vmatpush1.msra.mxu0 0.0
      %453 = vmatprep.mubr.f32.mxu0 0.0
      %454 = vmatmul.mubr.f32.gmra.mrb[0].mxu0 %v387
      %v455 = vpop.f32.mrb[0].mxu0
      %v456 = vadd.f32 0.0, %v455
      %v457 = vpop.f32.mrb[0].mxu0
      %458 = vdwg.mxu0
      %v460 = vsel %vm41, %v382, 0
      %462 = vmatprep.subr.mxu0 0.0
      %463 = vmatpush1.msra.mxu0 %v383
      %464 = vmatprep.subr.mxu0 0.0
      %465 = vmatpush1.msra.mxu0 0.0
      %466 = vmatprep.subr.mxu0 0.0
      %467 = vmatpush1.msra.mxu0 0.0
      %468 = vmatprep.subr.mxu0 0.0
      %469 = vmatpush1.msra.mxu0 0.0
      %470 = vmatprep.subr.mxu0 0.0
      %471 = vmatpush1.msra.mxu0 0.0
      %472 = vmatprep.subr.mxu0 0.0
      %473 = vmatpush1.msra.mxu0 0.0
      %474 = vmatprep.subr.mxu0 0.0
      %475 = vmatpush1.msra.mxu0 0.0
      %476 = vmatprep.subr.mxu0 0.0
      %477 = vmatpush1.msra.mxu0 0.0
      %478 = vmatprep.subr.mxu0 0.0
      %479 = vmatpush1.msra.mxu0 0.0
      %480 = vmatprep.subr.mxu0 0.0
      %481 = vmatpush1.msra.mxu0 0.0
      %482 = vmatprep.subr.mxu0 0.0
      %483 = vmatpush1.msra.mxu0 0.0
      %484 = vmatprep.subr.mxu0 0.0
      %485 = vmatpush1.msra.mxu0 0.0
      %486 = vmatprep.subr.mxu0 0.0
      %487 = vmatpush1.msra.mxu0 0.0
      %488 = vmatprep.subr.mxu0 0.0
      %489 = vmatpush1.msra.mxu0 0.0
      %490 = vmatprep.subr.mxu0 0.0
      %491 = vmatpush1.msra.mxu0 0.0
      %492 = vmatprep.subr.mxu0 0.0
      %493 = vmatpush1.msra.mxu0 0.0
      %494 = vmatprep.subr.mxu0 0.0
      %495 = vmatpush1.msra.mxu0 0.0
      %496 = vmatprep.subr.mxu0 0.0
      %497 = vmatpush1.msra.mxu0 0.0
      %498 = vmatprep.subr.mxu0 0.0
      %499 = vmatpush1.msra.mxu0 0.0
      %500 = vmatprep.subr.mxu0 0.0
      %501 = vmatpush1.msra.mxu0 0.0
      %502 = vmatprep.subr.mxu0 0.0
      %503 = vmatpush1.msra.mxu0 0.0
      %504 = vmatprep.subr.mxu0 0.0
      %505 = vmatpush1.msra.mxu0 0.0
      %506 = vmatprep.subr.mxu0 0.0
      %507 = vmatpush1.msra.mxu0 0.0
      %508 = vmatprep.subr.mxu0 0.0
      %509 = vmatpush1.msra.mxu0 0.0
      %510 = vmatprep.subr.mxu0 0.0
      %511 = vmatpush1.msra.mxu0 0.0
      %512 = vmatprep.subr.mxu0 0.0
      %513 = vmatpush1.msra.mxu0 0.0
      %514 = vmatprep.subr.mxu0 0.0
      %515 = vmatpush1.msra.mxu0 0.0
      %516 = vmatprep.subr.mxu0 0.0
      %517 = vmatpush1.msra.mxu0 0.0
      %518 = vmatprep.subr.mxu0 0.0
      %519 = vmatpush1.msra.mxu0 0.0
      %520 = vmatprep.subr.mxu0 0.0
      %521 = vmatpush1.msra.mxu0 0.0
      %522 = vmatprep.subr.mxu0 0.0
      %523 = vmatpush1.msra.mxu0 0.0
      %524 = vmatprep.subr.mxu0 0.0
      %525 = vmatpush1.msra.mxu0 0.0
      %526 = vmatprep.mubr.f32.mxu0 0.0
      %527 = vmatmul.mubr.f32.gmra.mrb[0].mxu0 %v460
      %v528 = vpop.f32.mrb[0].mxu0
      %v529 = vadd.f32 %v456, %v528
      %v530 = vpop.f32.mrb[0].mxu0
      %531 = vdwg.mxu0
      %v532 = vld [vmem:[%s7] sm:$0x1]
      %v534 = vlaneseq
      %v535 = vshrl.u32 %v534, 7
      %v536 = vsub.s32 0, %v535
      %v537 = vrot.slane %v532, %v536
      %v539 = vadd.f32 %v529, %v537
      %v540 = vlaneseq
      %v541 = vand.u32 %v540, 127
      %vm542 = vcmp.eq.s32.totalorder %v541, 3
      %v543 = vxor.u32 %v539, 2147483648
      %v544 = vmul.f32 %v543, 1.442695
      %v545 = vpow.pop %v544
      %v546 = vadd.f32 %v545, 1.0
      %v547 = vrcp.pop %v546
      %v548 = vmul.f32 1.0, %v547
      %v549 = vsel %vm542, %v548, %v539
      %550 = vst [vmem:[#allocation3] sm:$0x3] %v549
    $region41: #{tpu_custom_call.1} parent=1 // pred_fallthru
      _
    // Predicated region
    $region42: #{tpu_custom_call.1} parent=1 // pred_check
      _
    $region43: #{tpu_custom_call.1} parent=1 // pred_check_branch
      %552 = sbr.rel (0) target = $region45
    $region44: #{tpu_custom_call.1} parent=1 // pred_region
      %s554 = ssub.s32 32, 32
      %555 = vsyncadd [#allocation4], %s554
      %s557 = sshll.u32 [#allocation3], 4
      %s558 = int_to_ptr.vmem [resolvable:$true] %s557
      %560 = dma.vmem_to_hbm [thread:$0]  %s558, 32, %s8, [#allocation4]
    $region45: #{tpu_custom_call.1} parent=1 // pred_fallthru
      _
    // Predicated region
    $region46: #{tpu_custom_call.1} parent=1 // pred_check
      _
    $region47: #{tpu_custom_call.1} parent=1 // pred_check_branch
      %562 = sbr.rel (0) target = $region49
    $region48: #{tpu_custom_call.1} parent=1 // pred_region
      %563 = dma.done [#allocation4], 32
    $region49: #{tpu_custom_call.1} parent=1 // pred_fallthru
      _
    %564 = vsyncpa [#allocation4], 1

</llo_original>
